<compile_context>
chip_gen: v7x
topology: tpu7x:2x2x1
jax: 0.10.0
libtpu: 0.0.40
codegen_flags: <defaults>
</compile_context>

<pallas_src>
import math
from functools import partial

import jax
import jax.numpy as jnp
from jax.experimental import pallas as pl
from jax.experimental.pallas import tpu as pltpu

H = 32            # num_hidden
NUM_IN = 2 * H    # num_in = edge_dim + gathered node_dim (ProteinMPNN-style)
SCALE = 36.0
EPS = 1e-5


# ---------------------------------------------------------------------------
# elementwise helpers (used both inside the Pallas kernels and in the reference)
# ---------------------------------------------------------------------------
def _gelu(x):
    # tanh-approx GELU: the tanh runs on the EUP slot instead of ~20 VALU ops for an
    # erf polynomial.  Approximates PyTorch's exact-erf nn.GELU() to ~3e-3 abs.
    c = 0.7978845608028654
    return 0.5 * x * (1.0 + jnp.tanh(c * (x + 0.044715 * x * x * x)))


def _layer_norm(x, gamma, beta):
    mu = jnp.mean(x, axis=-1, keepdims=True)
    var = jnp.mean((x - mu) ** 2, axis=-1, keepdims=True)
    return (x - mu) * jax.lax.rsqrt(var + EPS) * gamma + beta


def _mxu(a, b):
    # Matmul with f32 accumulation; lhs is cast to the (possibly bf16) weight dtype right
    # before the dot so only the MXU ever sees bf16 (safe on v5e).
    return jnp.dot(a.astype(b.dtype), b, preferred_element_type=jnp.float32)


def _round_up(x, m):
    return (x + m - 1) // m * m


# ---------------------------------------------------------------------------
# Pallas kernels
# ---------------------------------------------------------------------------
def node_update_kernel(hv_ref, he_ref, hn_ref, ma_ref, mv_ref,
                       w1e_ref, w1n_ref, w1v_ref, w2_ref, w3_ref,
                       win_ref, wout_ref,
                       vecc_ref, bin_ref, vech_ref, exp_ref, fold_ref,
                       out_ref):
    # --- message MLP in lane-dense (tm, K*H) chunk layout -------------------
    p = (_mxu(he_ref[...], w1e_ref[...])           # h_E[i,j]   @ W1_e   (block-diag)
         + _mxu(hn_ref[...], w1n_ref[...])         # h_N[i,j]   @ W1_n   (block-diag)
         + _mxu(hv_ref[...], w1v_ref[...])         # h_V[i]     @ W1_v   (computed once/node)
         + vecc_ref[0:1, :])
    a = _gelu(p)
    a = _gelu(_mxu(a, w2_ref[...]) + vecc_ref[1:2, :])
    msg = _mxu(a, w3_ref[...]) + vecc_ref[2:3, :]           # 1/scale already folded in

    ma_exp = _mxu(ma_ref[...], exp_ref[...])                 # expand mask to (tm, K*H)
    dh = _mxu(msg * ma_exp, fold_ref[...])                   # sum over K chunks -> (tm, H)

    # --- residual + norm1 + FFN + norm2 + mask_V ----------------------------
    hv32 = hv_ref[...].astype(jnp.float32)
    x = _layer_norm(hv32 + dh, vech_ref[0:1, :], vech_ref[1:2, :])       # norm1

    ff = _gelu(_mxu(x, win_ref[...]) + bin_ref[...])                     # PositionWiseFFN
    dh2 = _mxu(ff, wout_ref[...]) + vech_ref[4:5, :]
    y = _layer_norm(x + dh2, vech_ref[2:3, :], vech_ref[3:4, :])         # norm2

    out_ref[...] = y * mv_ref[...]                                       # mask_V


def edge_update_kernel(hv_ref, he_ref, hn_ref,
                       w11e_ref, w11n_ref, w11v_ref, w12_ref, w13_ref,
                       vecc_ref, mean_ref,
                       out_ref):
    p = (_mxu(he_ref[...], w11e_ref[...])
         + _mxu(hn_ref[...], w11n_ref[...])
         + _mxu(hv_ref[...], w11v_ref[...])
         + vecc_ref[0:1, :])
    a = _gelu(p)
    a = _gelu(_mxu(a, w12_ref[...]) + vecc_ref[1:2, :])
    m = _mxu(a, w13_ref[...]) + vecc_ref[2:3, :]

    # residual + per-chunk LayerNorm (norm3) done entirely in the (tm, K*H) layout:
    # chunk means / variances come from an MXU matmul with a block-averaging matrix.
    x = he_ref[...].astype(jnp.float32) + m
    mu = _mxu(x, mean_ref[...])                 # per-chunk mean, broadcast within chunk
    d = x - mu
    var = _mxu(d * d, mean_ref[...])            # per-chunk variance, broadcast within chunk
    out_ref[...] = d * jax.lax.rsqrt(var + EPS) * vecc_ref[3:4, :] + vecc_ref[4:5, :]


# ---------------------------------------------------------------------------
# JAX glue: neighbor gather (gather_nodes)
# ---------------------------------------------------------------------------
def gather_nodes(nodes, e_idx):
    b, n, k = e_idx.shape
    c = nodes.shape[-1]
    flat = e_idx.reshape(b, n * k, 1)
    g = jnp.take_along_axis(nodes, jnp.broadcast_to(flat, (b, n * k, c)), axis=1)
    return g.reshape(b, n, k, c)
# TODO(synk): the neighbor gather itself still goes through an HBM intermediate; an
#             in-kernel gather via PrefetchScalarGridSpec + per-row DMA is a possible
#             follow-up once the rest of the pipeline is the bottleneck.


# ---------------------------------------------------------------------------
# host-side weight preparation for the lane-dense chunk layout
# ---------------------------------------------------------------------------
def _prep_mlp(p, names, k, h, scale, wdtype):
    (Wa, ba), (Wb, bb), (Wc, bc) = (p[n] for n in names)
    eye_k = jnp.eye(k, dtype=jnp.float32)

    def bd(w):                      # (h,h) -> block-diagonal (k*h, k*h)
        return jnp.kron(eye_k, w).astype(wdtype)

    def tile_row(v):                # (1,h) -> (1, k*h)
        return jnp.tile(v, (1, k))

    Wv, We, Wn = Wa[:h], Wa[h:2 * h], Wa[2 * h:]        # concat order: [h_V | h_E | h_N]
    Wcs, bcs = Wc / scale, bc / scale                   # fold 1/scale into last layer

    w_e = bd(We)
    w_n = bd(Wn)
    w_v = jnp.tile(Wv, (1, k)).astype(wdtype)           # (h, k*h): once-per-node term
    w_b = bd(Wb)
    w_c = bd(Wcs)
    vec_c = jnp.concatenate([tile_row(ba), tile_row(bb), tile_row(bcs)], axis=0)  # (3, k*h)
    return w_e, w_n, w_v, w_b, w_c, vec_c


# ---------------------------------------------------------------------------
# Wrapper
# ---------------------------------------------------------------------------
@partial(jax.jit, static_argnames=("tm_max", "use_bf16"))
def encoder_layer_forward(params, h_V, h_E, E_idx, mask_V, mask_attend,
                          tm_max=1024, use_bf16=True):
    b, n, h = h_V.shape
    k = E_idx.shape[-1]
    bn = b * n
    kh = k * h
    k_pad = _round_up(k, 8)
    wdtype = jnp.bfloat16 if use_bf16 else jnp.float32

    # Large row tiles (multiple of 16 for bf16 sublane packing), padded grid for any bn.
    n_blocks = -(-bn // tm_max)
    tm = _round_up(-(-bn // n_blocks), 16)
    bn_pad = tm * n_blocks
    pad = bn_pad - bn

    cp = pltpu.CompilerParams(dimension_semantics=("parallel",))

    def row_spec(width):
        return pl.BlockSpec((tm, width), lambda i: (i, 0))

    def full_spec(arr):
        return pl.BlockSpec(arr.shape, lambda i: (0, 0))      # all consts are 2-D, resident

    def pad_rows(x):
        return jnp.pad(x, ((0, pad),) + ((0, 0),) * (x.ndim - 1)) if pad else x

    # ---- small constant matrices used by the chunked layout (MXU-side helpers) ----
    eye_h = jnp.eye(h, dtype=jnp.float32)
    exp_mat = jnp.kron(jnp.eye(k, dtype=jnp.float32), jnp.ones((1, h), jnp.float32))
    exp_mat = jnp.pad(exp_mat, ((0, k_pad - k), (0, 0)))                  # (k_pad, kh)
    fold_mat = jnp.kron(jnp.ones((k, 1), jnp.float32), eye_h)             # (kh, h): chunk sum
    mean_mat = jnp.kron(jnp.eye(k, dtype=jnp.float32),
                        jnp.ones((h, h), jnp.float32) / h)                # (kh, kh): chunk mean

    # ---- prepared weights ----
    w1e, w1n, w1v, w2bd, w3bd, vecc1 = _prep_mlp(params, ("W1", "W2", "W3"), k, h, SCALE, wdtype)
    win = params["Win"][0].astype(wdtype)
    bin_ = params["Win"][1]
    wout = params["Wout"][0].astype(wdtype)
    vech = jnp.concatenate([params["norm1"][0], params["norm1"][1],
                            params["norm2"][0], params["norm2"][1],
                            params["Wout"][1]], axis=0)                   # (5, h)

    w11e, w11n, w11v, w12bd, w13bd, vecc2 = _prep_mlp(params, ("W11", "W12", "W13"),
                                                      k, h, 1.0, wdtype)
    vecc2 = jnp.concatenate([vecc2,
                             jnp.tile(params["norm3"][0], (1, k)),
                             jnp.tile(params["norm3"][1], (1, k))], axis=0)   # (5, kh)

    # ---- data: flat rows, channels last; edge rows lane-dense as (bn, K*H) ----
    hv = h_V.reshape(bn, h)
    he2 = h_E.reshape(bn, kh)
    hn2 = gather_nodes(h_V, E_idx).reshape(bn, kh)
    ma = jnp.pad(mask_attend.reshape(bn, k).astype(jnp.float32), ((0, 0), (0, k_pad - k)))
    mv = mask_V.reshape(bn, 1).astype(jnp.float32)

    hv_c = pad_rows(hv.astype(wdtype))
    he2_c = pad_rows(he2.astype(wdtype))
    hn2_c = pad_rows(hn2.astype(wdtype))
    ma_p = pad_rows(ma)
    mv_p = pad_rows(mv)

    # ---- first message block + node update --------------------------------
    node_consts = [w1e, w1n, w1v, w2bd, w3bd, win, wout,
                   vecc1, bin_, vech, exp_mat, fold_mat]

    h_V_new = pl.pallas_call(
        node_update_kernel,
        out_shape=jax.ShapeDtypeStruct((bn_pad, h), jnp.float32),
        grid=(n_blocks,),
        in_specs=[row_spec(h), row_spec(kh), row_spec(kh), row_spec(k_pad), row_spec(1)]
                 + [full_spec(w) for w in node_consts],
        out_specs=row_spec(h),
        compiler_params=cp,
    )(hv_c, he2_c, hn2_c, ma_p, mv_p, *node_consts)

    h_V_new = h_V_new[:bn]
    h_V_new3 = h_V_new.reshape(b, n, h)

    # ---- second message block + edge update (uses the *updated*, masked h_V) ----
    hn2b = gather_nodes(h_V_new3, E_idx).reshape(bn, kh)
    hvn_c = pad_rows(h_V_new.astype(wdtype))
    hn2b_c = pad_rows(hn2b.astype(wdtype))

    edge_consts = [w11e, w11n, w11v, w12bd, w13bd, vecc2, mean_mat]

    h_E_new = pl.pallas_call(
        edge_update_kernel,
        out_shape=jax.ShapeDtypeStruct((bn_pad, kh), jnp.float32),
        grid=(n_blocks,),
        in_specs=[row_spec(h), row_spec(kh), row_spec(kh)]
                 + [full_spec(w) for w in edge_consts],
        out_specs=row_spec(kh),                      # lane-dense (tm, 128) stores
        compiler_params=cp,
    )(hvn_c, he2_c, hn2b_c, *edge_consts)

    h_E_new = h_E_new[:bn].reshape(b, n, k, h)

    # TODO(synk): neigh_update(...) rigid-frame branch omitted (external IPA/Rigid deps);
    #             returning (h_V, h_E) without the h_v_update / R update.
    return h_V_new3, h_E_new


# ---------------------------------------------------------------------------
# Pure-JAX f32 reference (module math, no restructuring / no bf16) for verification
# ---------------------------------------------------------------------------
def reference_forward(p, h_V, h_E, E_idx, mask_V, mask_attend):
    def dot(a, w):
        return jnp.dot(a, w, preferred_element_type=jnp.float32)

    def build_h_EV(h_v, h_e, e_idx):
        h_nodes = gather_nodes(h_v, e_idx)
        h_nn = jnp.concatenate([h_e, h_nodes], axis=-1)
        h_v_expand = jnp.broadcast_to(h_v[:, :, None, :],
                                      h_nn.shape[:3] + (h_v.shape[-1],))
        return jnp.concatenate([h_v_expand, h_nn], axis=-1)

    h_EV = build_h_EV(h_V, h_E, E_idx)
    m = _gelu(dot(h_EV, p["W1"][0]) + p["W1"][1])
    m = _gelu(dot(m, p["W2"][0]) + p["W2"][1])
    m = dot(m, p["W3"][0]) + p["W3"][1]
    m = mask_attend[..., None] * m
    dh = jnp.sum(m, axis=-2) / SCALE
    hv = _layer_norm(h_V + dh, p["norm1"][0], p["norm1"][1])
    ff = _gelu(dot(hv, p["Win"][0]) + p["Win"][1])
    dh2 = dot(ff, p["Wout"][0]) + p["Wout"][1]
    hv = _layer_norm(hv + dh2, p["norm2"][0], p["norm2"][1])
    hv = mask_V[..., None] * hv

    h_EV2 = build_h_EV(hv, h_E, E_idx)
    m = _gelu(dot(h_EV2, p["W11"][0]) + p["W11"][1])
    m = _gelu(dot(m, p["W12"][0]) + p["W12"][1])
    m = dot(m, p["W13"][0]) + p["W13"][1]
    he = _layer_norm(h_E + m, p["norm3"][0], p["norm3"][1])
    return hv, he


# ---------------------------------------------------------------------------
# deterministic parameter init (shapes from EncoderLayer.__init__)
# ---------------------------------------------------------------------------
def init_params(key):
    p = {}

    def lin(k, din, dout):
        k1, k2 = jax.random.split(k)
        lim = 1.0 / math.sqrt(din)
        w = jax.random.uniform(k1, (din, dout), jnp.float32, -lim, lim)
        bias = jax.random.uniform(k2, (1, dout), jnp.float32, -lim, lim)
        return w, bias

    specs = [("W1", H + NUM_IN, H), ("W2", H, H), ("W3", H, H),
             ("W11", H + NUM_IN, H), ("W12", H, H), ("W13", H, H),
             ("Win", H, 4 * H), ("Wout", 4 * H, H)]
    ks = jax.random.split(key, len(specs))
    for (name, din, dout), k in zip(specs, ks):
        p[name] = lin(k, din, dout)
    for name in ("norm1", "norm2", "norm3"):
        p[name] = (jnp.ones((1, H), jnp.float32), jnp.zeros((1, H), jnp.float32))
    return p


# ---------------------------------------------------------------------------
if __name__ == "__main__":
    B, N, K = 2, 8, 4
    key = jax.random.PRNGKey(0)
    k_hv, k_he, k_idx, k_mask, k_param = jax.random.split(key, 5)

    h_V = jax.random.normal(k_hv, (B, N, H), jnp.float32)
    h_E = jax.random.normal(k_he, (B, N, K, H), jnp.float32)
    E_idx = jax.random.randint(k_idx, (B, N, K), 0, N)
    mask_V = (jax.random.uniform(k_mask, (B, N)) > 0.1).astype(jnp.float32)
    mask_attend = mask_V[..., None] * gather_nodes(mask_V[..., None], E_idx)[..., 0]

    params = init_params(k_param)

    h_V_out, h_E_out = encoder_layer_forward(params, h_V, h_E, E_idx,
                                             mask_V, mask_attend)
    jax.block_until_ready((h_V_out, h_E_out))

    h_V_ref, h_E_ref = reference_forward(params, h_V, h_E, E_idx,
                                         mask_V, mask_attend)

    assert bool(jnp.all(jnp.isfinite(h_V_out))) and bool(jnp.all(jnp.isfinite(h_E_out)))
    assert jnp.allclose(h_V_out, h_V_ref, atol=2e-2, rtol=2e-2), \
        float(jnp.max(jnp.abs(h_V_out - h_V_ref)))
    assert jnp.allclose(h_E_out, h_E_ref, atol=2e-2, rtol=2e-2), \
        float(jnp.max(jnp.abs(h_E_out - h_E_ref)))

    print("KERNEL_OK")
</pallas_src>

<mosaic_0001>
module attributes {stable_mosaic.version = 11 : i64} {
  func.func @node_update_kernel(%arg0: i32, %arg1: memref<16x32xbf16, #tpu.memory_space<vmem>>, %arg2: memref<16x128xbf16, #tpu.memory_space<vmem>>, %arg3: memref<16x128xbf16, #tpu.memory_space<vmem>>, %arg4: memref<16x8xf32, #tpu.memory_space<vmem>>, %arg5: memref<16x1xf32, #tpu.memory_space<vmem>>, %arg6: memref<128x128xbf16, #tpu.memory_space<vmem>>, %arg7: memref<128x128xbf16, #tpu.memory_space<vmem>>, %arg8: memref<32x128xbf16, #tpu.memory_space<vmem>>, %arg9: memref<128x128xbf16, #tpu.memory_space<vmem>>, %arg10: memref<128x128xbf16, #tpu.memory_space<vmem>>, %arg11: memref<32x128xbf16, #tpu.memory_space<vmem>>, %arg12: memref<128x32xbf16, #tpu.memory_space<vmem>>, %arg13: memref<3x128xf32, #tpu.memory_space<vmem>>, %arg14: memref<1x128xf32, #tpu.memory_space<vmem>>, %arg15: memref<5x32xf32, #tpu.memory_space<vmem>>, %arg16: memref<8x128xf32, #tpu.memory_space<vmem>>, %arg17: memref<128x32xf32, #tpu.memory_space<vmem>>, %arg18: memref<16x32xf32, #tpu.memory_space<vmem>>) attributes {dimension_semantics = [#tpu.dimension_semantics<parallel>], iteration_bounds = array<i64: 1>, scalar_prefetch = 0 : i64, scratch_operands = 0 : i64, tpu.core_type = #tpu.core_type<tc>, window_params = [{transform_indices = @transform_0, window_bounds = array<i64: 16, 32>}, {transform_indices = @transform_1, window_bounds = array<i64: 16, 128>}, {transform_indices = @transform_2, window_bounds = array<i64: 16, 128>}, {transform_indices = @transform_3, window_bounds = array<i64: 16, 8>}, {transform_indices = @transform_4, window_bounds = array<i64: 16, 1>}, {pipeline_mode = #tpu.pipeline_mode<synchronous>, transform_indices = @transform_5, window_bounds = array<i64: 128, 128>}, {pipeline_mode = #tpu.pipeline_mode<synchronous>, transform_indices = @transform_6, window_bounds = array<i64: 128, 128>}, {pipeline_mode = #tpu.pipeline_mode<synchronous>, transform_indices = @transform_7, window_bounds = array<i64: 32, 128>}, {pipeline_mode = #tpu.pipeline_mode<synchronous>, transform_indices = @transform_8, window_bounds = array<i64: 128, 128>}, {pipeline_mode = #tpu.pipeline_mode<synchronous>, transform_indices = @transform_9, window_bounds = array<i64: 128, 128>}, {pipeline_mode = #tpu.pipeline_mode<synchronous>, transform_indices = @transform_10, window_bounds = array<i64: 32, 128>}, {pipeline_mode = #tpu.pipeline_mode<synchronous>, transform_indices = @transform_11, window_bounds = array<i64: 128, 32>}, {pipeline_mode = #tpu.pipeline_mode<synchronous>, transform_indices = @transform_12, window_bounds = array<i64: 3, 128>}, {pipeline_mode = #tpu.pipeline_mode<synchronous>, transform_indices = @transform_13, window_bounds = array<i64: 1, 128>}, {pipeline_mode = #tpu.pipeline_mode<synchronous>, transform_indices = @transform_14, window_bounds = array<i64: 5, 32>}, {pipeline_mode = #tpu.pipeline_mode<synchronous>, transform_indices = @transform_15, window_bounds = array<i64: 8, 128>}, {pipeline_mode = #tpu.pipeline_mode<synchronous>, transform_indices = @transform_16, window_bounds = array<i64: 128, 32>}, {transform_indices = @transform_17, window_bounds = array<i64: 16, 32>}]} {
    %c0 = arith.constant 0 : index
    %c0_0 = arith.constant 0 : index
    %0 = vector.load %arg2[%c0, %c0_0] : memref<16x128xbf16, #tpu.memory_space<vmem>>, vector<16x128xbf16>
    %c0_1 = arith.constant 0 : index
    %c0_2 = arith.constant 0 : index
    %1 = vector.load %arg6[%c0_1, %c0_2] : memref<128x128xbf16, #tpu.memory_space<vmem>>, vector<128x128xbf16>
    %cst = arith.constant dense<0.000000e+00> : vector<16x128xf32>
    %2 = tpu.matmul %0, %1, %cst {dimension_numbers = #tpu.dot_dimension_numbers<[1], [0], [0], [1], [0, 0, 1, 1], [], []>} : vector<16x128xbf16>, vector<128x128xbf16>, vector<16x128xf32> -> vector<16x128xf32>
    %c0_3 = arith.constant 0 : index
    %c0_4 = arith.constant 0 : index
    %3 = vector.load %arg3[%c0_3, %c0_4] : memref<16x128xbf16, #tpu.memory_space<vmem>>, vector<16x128xbf16>
    %c0_5 = arith.constant 0 : index
    %c0_6 = arith.constant 0 : index
    %4 = vector.load %arg7[%c0_5, %c0_6] : memref<128x128xbf16, #tpu.memory_space<vmem>>, vector<128x128xbf16>
    %cst_7 = arith.constant dense<0.000000e+00> : vector<16x128xf32>
    %5 = tpu.matmul %3, %4, %cst_7 {dimension_numbers = #tpu.dot_dimension_numbers<[1], [0], [0], [1], [0, 0, 1, 1], [], []>} : vector<16x128xbf16>, vector<128x128xbf16>, vector<16x128xf32> -> vector<16x128xf32>
    %6 = arith.addf %2, %5 : vector<16x128xf32>
    %c0_8 = arith.constant 0 : index
    %c0_9 = arith.constant 0 : index
    %7 = vector.load %arg1[%c0_8, %c0_9] : memref<16x32xbf16, #tpu.memory_space<vmem>>, vector<16x32xbf16>
    %c0_10 = arith.constant 0 : index
    %c0_11 = arith.constant 0 : index
    %8 = vector.load %arg8[%c0_10, %c0_11] : memref<32x128xbf16, #tpu.memory_space<vmem>>, vector<32x128xbf16>
    %cst_12 = arith.constant dense<0.000000e+00> : vector<16x128xf32>
    %9 = tpu.matmul %7, %8, %cst_12 {dimension_numbers = #tpu.dot_dimension_numbers<[1], [0], [0], [1], [0, 0, 1, 1], [], []>} : vector<16x32xbf16>, vector<32x128xbf16>, vector<16x128xf32> -> vector<16x128xf32>
    %10 = arith.addf %6, %9 : vector<16x128xf32>
    %c0_13 = arith.constant 0 : index
    %c0_14 = arith.constant 0 : index
    %11 = vector.load %arg13[%c0_13, %c0_14] : memref<3x128xf32, #tpu.memory_space<vmem>>, vector<1x128xf32>
    %12 = vector.broadcast %11 : vector<1x128xf32> to vector<16x128xf32>
    %13 = arith.addf %10, %12 : vector<16x128xf32>
    %cst_15 = arith.constant 5.000000e-01 : f32
    %14 = vector.broadcast %cst_15 : f32 to vector<16x128xf32>
    %15 = arith.mulf %14, %13 : vector<16x128xf32>
    %cst_16 = arith.constant 4.471500e-02 : f32
    %16 = vector.broadcast %cst_16 : f32 to vector<16x128xf32>
    %17 = arith.mulf %16, %13 : vector<16x128xf32>
    %18 = arith.mulf %17, %13 : vector<16x128xf32>
    %19 = arith.mulf %18, %13 : vector<16x128xf32>
    %20 = arith.addf %13, %19 : vector<16x128xf32>
    %cst_17 = arith.constant 0.797884583 : f32
    %21 = vector.broadcast %cst_17 : f32 to vector<16x128xf32>
    %22 = arith.mulf %21, %20 : vector<16x128xf32>
    %23 = math.tanh %22 : vector<16x128xf32>
    %cst_18 = arith.constant 1.000000e+00 : f32
    %24 = vector.broadcast %cst_18 : f32 to vector<16x128xf32>
    %25 = arith.addf %24, %23 : vector<16x128xf32>
    %26 = arith.mulf %15, %25 : vector<16x128xf32>
    %c0_19 = arith.constant 0 : index
    %c0_20 = arith.constant 0 : index
    %27 = vector.load %arg9[%c0_19, %c0_20] : memref<128x128xbf16, #tpu.memory_space<vmem>>, vector<128x128xbf16>
    %28 = arith.truncf %26 : vector<16x128xf32> to vector<16x128xbf16>
    %cst_21 = arith.constant dense<0.000000e+00> : vector<16x128xf32>
    %29 = tpu.matmul %28, %27, %cst_21 {dimension_numbers = #tpu.dot_dimension_numbers<[1], [0], [0], [1], [0, 0, 1, 1], [], []>} : vector<16x128xbf16>, vector<128x128xbf16>, vector<16x128xf32> -> vector<16x128xf32>
    %c1 = arith.constant 1 : index
    %c0_22 = arith.constant 0 : index
    %30 = vector.load %arg13[%c1, %c0_22] : memref<3x128xf32, #tpu.memory_space<vmem>>, vector<1x128xf32>
    %31 = vector.broadcast %30 : vector<1x128xf32> to vector<16x128xf32>
    %32 = arith.addf %29, %31 : vector<16x128xf32>
    %cst_23 = arith.constant 5.000000e-01 : f32
    %33 = vector.broadcast %cst_23 : f32 to vector<16x128xf32>
    %34 = arith.mulf %33, %32 : vector<16x128xf32>
    %cst_24 = arith.constant 4.471500e-02 : f32
    %35 = vector.broadcast %cst_24 : f32 to vector<16x128xf32>
    %36 = arith.mulf %35, %32 : vector<16x128xf32>
    %37 = arith.mulf %36, %32 : vector<16x128xf32>
    %38 = arith.mulf %37, %32 : vector<16x128xf32>
    %39 = arith.addf %32, %38 : vector<16x128xf32>
    %cst_25 = arith.constant 0.797884583 : f32
    %40 = vector.broadcast %cst_25 : f32 to vector<16x128xf32>
    %41 = arith.mulf %40, %39 : vector<16x128xf32>
    %42 = math.tanh %41 : vector<16x128xf32>
    %cst_26 = arith.constant 1.000000e+00 : f32
    %43 = vector.broadcast %cst_26 : f32 to vector<16x128xf32>
    %44 = arith.addf %43, %42 : vector<16x128xf32>
    %45 = arith.mulf %34, %44 : vector<16x128xf32>
    %c0_27 = arith.constant 0 : index
    %c0_28 = arith.constant 0 : index
    %46 = vector.load %arg10[%c0_27, %c0_28] : memref<128x128xbf16, #tpu.memory_space<vmem>>, vector<128x128xbf16>
    %47 = arith.truncf %45 : vector<16x128xf32> to vector<16x128xbf16>
    %cst_29 = arith.constant dense<0.000000e+00> : vector<16x128xf32>
    %48 = tpu.matmul %47, %46, %cst_29 {dimension_numbers = #tpu.dot_dimension_numbers<[1], [0], [0], [1], [0, 0, 1, 1], [], []>} : vector<16x128xbf16>, vector<128x128xbf16>, vector<16x128xf32> -> vector<16x128xf32>
    %c2 = arith.constant 2 : index
    %c0_30 = arith.constant 0 : index
    %49 = vector.load %arg13[%c2, %c0_30] : memref<3x128xf32, #tpu.memory_space<vmem>>, vector<1x128xf32>
    %50 = vector.broadcast %49 : vector<1x128xf32> to vector<16x128xf32>
    %51 = arith.addf %48, %50 : vector<16x128xf32>
    %c0_31 = arith.constant 0 : index
    %c0_32 = arith.constant 0 : index
    %52 = vector.load %arg4[%c0_31, %c0_32] : memref<16x8xf32, #tpu.memory_space<vmem>>, vector<16x8xf32>
    %c0_33 = arith.constant 0 : index
    %c0_34 = arith.constant 0 : index
    %53 = vector.load %arg16[%c0_33, %c0_34] : memref<8x128xf32, #tpu.memory_space<vmem>>, vector<8x128xf32>
    %cst_35 = arith.constant dense<0.000000e+00> : vector<16x128xf32>
    %54 = tpu.matmul %52, %53, %cst_35 {dimension_numbers = #tpu.dot_dimension_numbers<[1], [0], [0], [1], [0, 0, 1, 1], [], []>} : vector<16x8xf32>, vector<8x128xf32>, vector<16x128xf32> -> vector<16x128xf32>
    %55 = arith.mulf %51, %54 : vector<16x128xf32>
    %c0_36 = arith.constant 0 : index
    %c0_37 = arith.constant 0 : index
    %56 = vector.load %arg17[%c0_36, %c0_37] : memref<128x32xf32, #tpu.memory_space<vmem>>, vector<128x32xf32>
    %cst_38 = arith.constant dense<0.000000e+00> : vector<16x32xf32>
    %57 = tpu.matmul %55, %56, %cst_38 {dimension_numbers = #tpu.dot_dimension_numbers<[1], [0], [0], [1], [0, 0, 1, 1], [], []>} : vector<16x128xf32>, vector<128x32xf32>, vector<16x32xf32> -> vector<16x32xf32>
    %c0_39 = arith.constant 0 : index
    %c0_40 = arith.constant 0 : index
    %58 = vector.load %arg1[%c0_39, %c0_40] : memref<16x32xbf16, #tpu.memory_space<vmem>>, vector<16x32xbf16>
    %59 = arith.extf %58 : vector<16x32xbf16> to vector<16x32xf32>
    %60 = arith.addf %59, %57 : vector<16x32xf32>
    %c0_41 = arith.constant 0 : index
    %c0_42 = arith.constant 0 : index
    %61 = vector.load %arg15[%c0_41, %c0_42] : memref<5x32xf32, #tpu.memory_space<vmem>>, vector<1x32xf32>
    %c1_43 = arith.constant 1 : index
    %c0_44 = arith.constant 0 : index
    %62 = vector.load %arg15[%c1_43, %c0_44] : memref<5x32xf32, #tpu.memory_space<vmem>>, vector<1x32xf32>
    %cst_45 = arith.constant dense<0.000000e+00> : vector<16xf32>
    %63 = vector.multi_reduction <add>, %60, %cst_45 [1] : vector<16x32xf32> to vector<16xf32>
    %64 = vector.shape_cast %63 : vector<16xf32> to vector<16x1xf32>
    %cst_46 = arith.constant 3.200000e+01 : f32
    %65 = vector.broadcast %cst_46 : f32 to vector<16x1xf32>
    %66 = arith.divf %64, %65 : vector<16x1xf32>
    %67 = vector.broadcast %66 : vector<16x1xf32> to vector<16x32xf32>
    %68 = arith.subf %60, %67 : vector<16x32xf32>
    %69 = arith.mulf %68, %68 : vector<16x32xf32>
    %cst_47 = arith.constant dense<0.000000e+00> : vector<16xf32>
    %70 = vector.multi_reduction <add>, %69, %cst_47 [1] : vector<16x32xf32> to vector<16xf32>
    %71 = vector.shape_cast %70 : vector<16xf32> to vector<16x1xf32>
    %cst_48 = arith.constant 3.200000e+01 : f32
    %72 = vector.broadcast %cst_48 : f32 to vector<16x1xf32>
    %73 = arith.divf %71, %72 : vector<16x1xf32>
    %74 = vector.broadcast %66 : vector<16x1xf32> to vector<16x32xf32>
    %75 = arith.subf %60, %74 : vector<16x32xf32>
    %cst_49 = arith.constant 9.99999974E-6 : f32
    %76 = vector.broadcast %cst_49 : f32 to vector<16x1xf32>
    %77 = arith.addf %73, %76 : vector<16x1xf32>
    %78 = math.rsqrt %77 : vector<16x1xf32>
    %79 = vector.broadcast %78 : vector<16x1xf32> to vector<16x32xf32>
    %80 = arith.mulf %75, %79 : vector<16x32xf32>
    %81 = vector.broadcast %61 : vector<1x32xf32> to vector<16x32xf32>
    %82 = arith.mulf %80, %81 : vector<16x32xf32>
    %83 = vector.broadcast %62 : vector<1x32xf32> to vector<16x32xf32>
    %84 = arith.addf %82, %83 : vector<16x32xf32>
    %c0_50 = arith.constant 0 : index
    %c0_51 = arith.constant 0 : index
    %85 = vector.load %arg11[%c0_50, %c0_51] : memref<32x128xbf16, #tpu.memory_space<vmem>>, vector<32x128xbf16>
    %86 = arith.truncf %84 : vector<16x32xf32> to vector<16x32xbf16>
    %cst_52 = arith.constant dense<0.000000e+00> : vector<16x128xf32>
    %87 = tpu.matmul %86, %85, %cst_52 {dimension_numbers = #tpu.dot_dimension_numbers<[1], [0], [0], [1], [0, 0, 1, 1], [], []>} : vector<16x32xbf16>, vector<32x128xbf16>, vector<16x128xf32> -> vector<16x128xf32>
    %c0_53 = arith.constant 0 : index
    %c0_54 = arith.constant 0 : index
    %88 = vector.load %arg14[%c0_53, %c0_54] : memref<1x128xf32, #tpu.memory_space<vmem>>, vector<1x128xf32>
    %89 = vector.broadcast %88 : vector<1x128xf32> to vector<16x128xf32>
    %90 = arith.addf %87, %89 : vector<16x128xf32>
    %cst_55 = arith.constant 5.000000e-01 : f32
    %91 = vector.broadcast %cst_55 : f32 to vector<16x128xf32>
    %92 = arith.mulf %91, %90 : vector<16x128xf32>
    %cst_56 = arith.constant 4.471500e-02 : f32
    %93 = vector.broadcast %cst_56 : f32 to vector<16x128xf32>
    %94 = arith.mulf %93, %90 : vector<16x128xf32>
    %95 = arith.mulf %94, %90 : vector<16x128xf32>
    %96 = arith.mulf %95, %90 : vector<16x128xf32>
    %97 = arith.addf %90, %96 : vector<16x128xf32>
    %cst_57 = arith.constant 0.797884583 : f32
    %98 = vector.broadcast %cst_57 : f32 to vector<16x128xf32>
    %99 = arith.mulf %98, %97 : vector<16x128xf32>
    %100 = math.tanh %99 : vector<16x128xf32>
    %cst_58 = arith.constant 1.000000e+00 : f32
    %101 = vector.broadcast %cst_58 : f32 to vector<16x128xf32>
    %102 = arith.addf %101, %100 : vector<16x128xf32>
    %103 = arith.mulf %92, %102 : vector<16x128xf32>
    %c0_59 = arith.constant 0 : index
    %c0_60 = arith.constant 0 : index
    %104 = vector.load %arg12[%c0_59, %c0_60] : memref<128x32xbf16, #tpu.memory_space<vmem>>, vector<128x32xbf16>
    %105 = arith.truncf %103 : vector<16x128xf32> to vector<16x128xbf16>
    %cst_61 = arith.constant dense<0.000000e+00> : vector<16x32xf32>
    %106 = tpu.matmul %105, %104, %cst_61 {dimension_numbers = #tpu.dot_dimension_numbers<[1], [0], [0], [1], [0, 0, 1, 1], [], []>} : vector<16x128xbf16>, vector<128x32xbf16>, vector<16x32xf32> -> vector<16x32xf32>
    %c4 = arith.constant 4 : index
    %c0_62 = arith.constant 0 : index
    %107 = vector.load %arg15[%c4, %c0_62] : memref<5x32xf32, #tpu.memory_space<vmem>>, vector<1x32xf32>
    %108 = vector.broadcast %107 : vector<1x32xf32> to vector<16x32xf32>
    %109 = arith.addf %106, %108 : vector<16x32xf32>
    %110 = arith.addf %84, %109 : vector<16x32xf32>
    %c2_63 = arith.constant 2 : index
    %c0_64 = arith.constant 0 : index
    %111 = vector.load %arg15[%c2_63, %c0_64] : memref<5x32xf32, #tpu.memory_space<vmem>>, vector<1x32xf32>
    %c3 = arith.constant 3 : index
    %c0_65 = arith.constant 0 : index
    %112 = vector.load %arg15[%c3, %c0_65] : memref<5x32xf32, #tpu.memory_space<vmem>>, vector<1x32xf32>
    %cst_66 = arith.constant dense<0.000000e+00> : vector<16xf32>
    %113 = vector.multi_reduction <add>, %110, %cst_66 [1] : vector<16x32xf32> to vector<16xf32>
    %114 = vector.shape_cast %113 : vector<16xf32> to vector<16x1xf32>
    %cst_67 = arith.constant 3.200000e+01 : f32
    %115 = vector.broadcast %cst_67 : f32 to vector<16x1xf32>
    %116 = arith.divf %114, %115 : vector<16x1xf32>
    %117 = vector.broadcast %116 : vector<16x1xf32> to vector<16x32xf32>
    %118 = arith.subf %110, %117 : vector<16x32xf32>
    %119 = arith.mulf %118, %118 : vector<16x32xf32>
    %cst_68 = arith.constant dense<0.000000e+00> : vector<16xf32>
    %120 = vector.multi_reduction <add>, %119, %cst_68 [1] : vector<16x32xf32> to vector<16xf32>
    %121 = vector.shape_cast %120 : vector<16xf32> to vector<16x1xf32>
    %cst_69 = arith.constant 3.200000e+01 : f32
    %122 = vector.broadcast %cst_69 : f32 to vector<16x1xf32>
    %123 = arith.divf %121, %122 : vector<16x1xf32>
    %124 = vector.broadcast %116 : vector<16x1xf32> to vector<16x32xf32>
    %125 = arith.subf %110, %124 : vector<16x32xf32>
    %cst_70 = arith.constant 9.99999974E-6 : f32
    %126 = vector.broadcast %cst_70 : f32 to vector<16x1xf32>
    %127 = arith.addf %123, %126 : vector<16x1xf32>
    %128 = math.rsqrt %127 : vector<16x1xf32>
    %129 = vector.broadcast %128 : vector<16x1xf32> to vector<16x32xf32>
    %130 = arith.mulf %125, %129 : vector<16x32xf32>
    %131 = vector.broadcast %111 : vector<1x32xf32> to vector<16x32xf32>
    %132 = arith.mulf %130, %131 : vector<16x32xf32>
    %133 = vector.broadcast %112 : vector<1x32xf32> to vector<16x32xf32>
    %134 = arith.addf %132, %133 : vector<16x32xf32>
    %c0_71 = arith.constant 0 : index
    %c0_72 = arith.constant 0 : index
    %135 = vector.load %arg5[%c0_71, %c0_72] : memref<16x1xf32, #tpu.memory_space<vmem>>, vector<16x1xf32>
    %136 = vector.broadcast %135 : vector<16x1xf32> to vector<16x32xf32>
    %137 = arith.mulf %134, %136 : vector<16x32xf32>
    %c0_73 = arith.constant 0 : index
    %c0_74 = arith.constant 0 : index
    %138 = vector.load %arg18[%c0_73, %c0_74] : memref<16x32xf32, #tpu.memory_space<vmem>>, vector<16x32xf32>
    tpu.vector_store %arg18[%c0_73, %c0_74], %137 {strides = array<i32>} : memref<16x32xf32, #tpu.memory_space<vmem>>, vector<16x32xf32>,
    return
  }
  func.func @transform_0(%arg0: i32) -> (i32, i32) {
    %c0_i32 = arith.constant 0 : i32
    %c0_i32_0 = arith.constant 0 : i32
    return %arg0, %c0_i32 : i32, i32
  }
  func.func @transform_1(%arg0: i32) -> (i32, i32) {
    %c0_i32 = arith.constant 0 : i32
    %c0_i32_0 = arith.constant 0 : i32
    return %arg0, %c0_i32 : i32, i32
  }
  func.func @transform_2(%arg0: i32) -> (i32, i32) {
    %c0_i32 = arith.constant 0 : i32
    %c0_i32_0 = arith.constant 0 : i32
    return %arg0, %c0_i32 : i32, i32
  }
  func.func @transform_3(%arg0: i32) -> (i32, i32) {
    %c0_i32 = arith.constant 0 : i32
    %c0_i32_0 = arith.constant 0 : i32
    return %arg0, %c0_i32 : i32, i32
  }
  func.func @transform_4(%arg0: i32) -> (i32, i32) {
    %c0_i32 = arith.constant 0 : i32
    %c0_i32_0 = arith.constant 0 : i32
    return %arg0, %c0_i32 : i32, i32
  }
  func.func @transform_5(%arg0: i32) -> (i32, i32) {
    %c0_i32 = arith.constant 0 : i32
    %c0_i32_0 = arith.constant 0 : i32
    %c0_i32_1 = arith.constant 0 : i32
    return %c0_i32, %c0_i32_0 : i32, i32
  }
  func.func @transform_6(%arg0: i32) -> (i32, i32) {
    %c0_i32 = arith.constant 0 : i32
    %c0_i32_0 = arith.constant 0 : i32
    %c0_i32_1 = arith.constant 0 : i32
    return %c0_i32, %c0_i32_0 : i32, i32
  }
  func.func @transform_7(%arg0: i32) -> (i32, i32) {
    %c0_i32 = arith.constant 0 : i32
    %c0_i32_0 = arith.constant 0 : i32
    %c0_i32_1 = arith.constant 0 : i32
    return %c0_i32, %c0_i32_0 : i32, i32
  }
  func.func @transform_8(%arg0: i32) -> (i32, i32) {
    %c0_i32 = arith.constant 0 : i32
    %c0_i32_0 = arith.constant 0 : i32
    %c0_i32_1 = arith.constant 0 : i32
    return %c0_i32, %c0_i32_0 : i32, i32
  }
  func.func @transform_9(%arg0: i32) -> (i32, i32) {
    %c0_i32 = arith.constant 0 : i32
    %c0_i32_0 = arith.constant 0 : i32
    %c0_i32_1 = arith.constant 0 : i32
    return %c0_i32, %c0_i32_0 : i32, i32
  }
  func.func @transform_10(%arg0: i32) -> (i32, i32) {
    %c0_i32 = arith.constant 0 : i32
    %c0_i32_0 = arith.constant 0 : i32
    %c0_i32_1 = arith.constant 0 : i32
    return %c0_i32, %c0_i32_0 : i32, i32
  }
  func.func @transform_11(%arg0: i32) -> (i32, i32) {
    %c0_i32 = arith.constant 0 : i32
    %c0_i32_0 = arith.constant 0 : i32
    %c0_i32_1 = arith.constant 0 : i32
    return %c0_i32, %c0_i32_0 : i32, i32
  }
  func.func @transform_12(%arg0: i32) -> (i32, i32) {
    %c0_i32 = arith.constant 0 : i32
    %c0_i32_0 = arith.constant 0 : i32
    %c0_i32_1 = arith.constant 0 : i32
    return %c0_i32, %c0_i32_0 : i32, i32
  }
  func.func @transform_13(%arg0: i32) -> (i32, i32) {
    %c0_i32 = arith.constant 0 : i32
    %c0_i32_0 = arith.constant 0 : i32
    %c0_i32_1 = arith.constant 0 : i32
    return %c0_i32, %c0_i32_0 : i32, i32
  }
  func.func @transform_14(%arg0: i32) -> (i32, i32) {
    %c0_i32 = arith.constant 0 : i32
    %c0_i32_0 = arith.constant 0 : i32
    %c0_i32_1 = arith.constant 0 : i32
    return %c0_i32, %c0_i32_0 : i32, i32
  }
  func.func @transform_15(%arg0: i32) -> (i32, i32) {
    %c0_i32 = arith.constant 0 : i32
    %c0_i32_0 = arith.constant 0 : i32
    %c0_i32_1 = arith.constant 0 : i32
    return %c0_i32, %c0_i32_0 : i32, i32
  }
  func.func @transform_16(%arg0: i32) -> (i32, i32) {
    %c0_i32 = arith.constant 0 : i32
    %c0_i32_0 = arith.constant 0 : i32
    %c0_i32_1 = arith.constant 0 : i32
    return %c0_i32, %c0_i32_0 : i32, i32
  }
  func.func @transform_17(%arg0: i32) -> (i32, i32) {
    %c0_i32 = arith.constant 0 : i32
    %c0_i32_0 = arith.constant 0 : i32
    return %arg0, %c0_i32 : i32, i32
  }
}

module attributes {stable_mosaic.version = 11 : i64} {
  func.func @edge_update_kernel(%arg0: i32, %arg1: memref<16x32xbf16, #tpu.memory_space<vmem>>, %arg2: memref<16x128xbf16, #tpu.memory_space<vmem>>, %arg3: memref<16x128xbf16, #tpu.memory_space<vmem>>, %arg4: memref<128x128xbf16, #tpu.memory_space<vmem>>, %arg5: memref<128x128xbf16, #tpu.memory_space<vmem>>, %arg6: memref<32x128xbf16, #tpu.memory_space<vmem>>, %arg7: memref<128x128xbf16, #tpu.memory_space<vmem>>, %arg8: memref<128x128xbf16, #tpu.memory_space<vmem>>, %arg9: memref<5x128xf32, #tpu.memory_space<vmem>>, %arg10: memref<128x128xf32, #tpu.memory_space<vmem>>, %arg11: memref<16x128xf32, #tpu.memory_space<vmem>>) attributes {dimension_semantics = [#tpu.dimension_semantics<parallel>], iteration_bounds = array<i64: 1>, scalar_prefetch = 0 : i64, scratch_operands = 0 : i64, tpu.core_type = #tpu.core_type<tc>, window_params = [{transform_indices = @transform_0, window_bounds = array<i64: 16, 32>}, {transform_indices = @transform_1, window_bounds = array<i64: 16, 128>}, {transform_indices = @transform_2, window_bounds = array<i64: 16, 128>}, {pipeline_mode = #tpu.pipeline_mode<synchronous>, transform_indices = @transform_3, window_bounds = array<i64: 128, 128>}, {pipeline_mode = #tpu.pipeline_mode<synchronous>, transform_indices = @transform_4, window_bounds = array<i64: 128, 128>}, {pipeline_mode = #tpu.pipeline_mode<synchronous>, transform_indices = @transform_5, window_bounds = array<i64: 32, 128>}, {pipeline_mode = #tpu.pipeline_mode<synchronous>, transform_indices = @transform_6, window_bounds = array<i64: 128, 128>}, {pipeline_mode = #tpu.pipeline_mode<synchronous>, transform_indices = @transform_7, window_bounds = array<i64: 128, 128>}, {pipeline_mode = #tpu.pipeline_mode<synchronous>, transform_indices = @transform_8, window_bounds = array<i64: 5, 128>}, {pipeline_mode = #tpu.pipeline_mode<synchronous>, transform_indices = @transform_9, window_bounds = array<i64: 128, 128>}, {transform_indices = @transform_10, window_bounds = array<i64: 16, 128>}]} {
    %c0 = arith.constant 0 : index
    %c0_0 = arith.constant 0 : index
    %0 = vector.load %arg2[%c0, %c0_0] : memref<16x128xbf16, #tpu.memory_space<vmem>>, vector<16x128xbf16>
    %c0_1 = arith.constant 0 : index
    %c0_2 = arith.constant 0 : index
    %1 = vector.load %arg4[%c0_1, %c0_2] : memref<128x128xbf16, #tpu.memory_space<vmem>>, vector<128x128xbf16>
    %cst = arith.constant dense<0.000000e+00> : vector<16x128xf32>
    %2 = tpu.matmul %0, %1, %cst {dimension_numbers = #tpu.dot_dimension_numbers<[1], [0], [0], [1], [0, 0, 1, 1], [], []>} : vector<16x128xbf16>, vector<128x128xbf16>, vector<16x128xf32> -> vector<16x128xf32>
    %c0_3 = arith.constant 0 : index
    %c0_4 = arith.constant 0 : index
    %3 = vector.load %arg3[%c0_3, %c0_4] : memref<16x128xbf16, #tpu.memory_space<vmem>>, vector<16x128xbf16>
    %c0_5 = arith.constant 0 : index
    %c0_6 = arith.constant 0 : index
    %4 = vector.load %arg5[%c0_5, %c0_6] : memref<128x128xbf16, #tpu.memory_space<vmem>>, vector<128x128xbf16>
    %cst_7 = arith.constant dense<0.000000e+00> : vector<16x128xf32>
    %5 = tpu.matmul %3, %4, %cst_7 {dimension_numbers = #tpu.dot_dimension_numbers<[1], [0], [0], [1], [0, 0, 1, 1], [], []>} : vector<16x128xbf16>, vector<128x128xbf16>, vector<16x128xf32> -> vector<16x128xf32>
    %6 = arith.addf %2, %5 : vector<16x128xf32>
    %c0_8 = arith.constant 0 : index
    %c0_9 = arith.constant 0 : index
    %7 = vector.load %arg1[%c0_8, %c0_9] : memref<16x32xbf16, #tpu.memory_space<vmem>>, vector<16x32xbf16>
    %c0_10 = arith.constant 0 : index
    %c0_11 = arith.constant 0 : index
    %8 = vector.load %arg6[%c0_10, %c0_11] : memref<32x128xbf16, #tpu.memory_space<vmem>>, vector<32x128xbf16>
    %cst_12 = arith.constant dense<0.000000e+00> : vector<16x128xf32>
    %9 = tpu.matmul %7, %8, %cst_12 {dimension_numbers = #tpu.dot_dimension_numbers<[1], [0], [0], [1], [0, 0, 1, 1], [], []>} : vector<16x32xbf16>, vector<32x128xbf16>, vector<16x128xf32> -> vector<16x128xf32>
    %10 = arith.addf %6, %9 : vector<16x128xf32>
    %c0_13 = arith.constant 0 : index
    %c0_14 = arith.constant 0 : index
    %11 = vector.load %arg9[%c0_13, %c0_14] : memref<5x128xf32, #tpu.memory_space<vmem>>, vector<1x128xf32>
    %12 = vector.broadcast %11 : vector<1x128xf32> to vector<16x128xf32>
    %13 = arith.addf %10, %12 : vector<16x128xf32>
    %cst_15 = arith.constant 5.000000e-01 : f32
    %14 = vector.broadcast %cst_15 : f32 to vector<16x128xf32>
    %15 = arith.mulf %14, %13 : vector<16x128xf32>
    %cst_16 = arith.constant 4.471500e-02 : f32
    %16 = vector.broadcast %cst_16 : f32 to vector<16x128xf32>
    %17 = arith.mulf %16, %13 : vector<16x128xf32>
    %18 = arith.mulf %17, %13 : vector<16x128xf32>
    %19 = arith.mulf %18, %13 : vector<16x128xf32>
    %20 = arith.addf %13, %19 : vector<16x128xf32>
    %cst_17 = arith.constant 0.797884583 : f32
    %21 = vector.broadcast %cst_17 : f32 to vector<16x128xf32>
    %22 = arith.mulf %21, %20 : vector<16x128xf32>
    %23 = math.tanh %22 : vector<16x128xf32>
    %cst_18 = arith.constant 1.000000e+00 : f32
    %24 = vector.broadcast %cst_18 : f32 to vector<16x128xf32>
    %25 = arith.addf %24, %23 : vector<16x128xf32>
    %26 = arith.mulf %15, %25 : vector<16x128xf32>
    %c0_19 = arith.constant 0 : index
    %c0_20 = arith.constant 0 : index
    %27 = vector.load %arg7[%c0_19, %c0_20] : memref<128x128xbf16, #tpu.memory_space<vmem>>, vector<128x128xbf16>
    %28 = arith.truncf %26 : vector<16x128xf32> to vector<16x128xbf16>
    %cst_21 = arith.constant dense<0.000000e+00> : vector<16x128xf32>
    %29 = tpu.matmul %28, %27, %cst_21 {dimension_numbers = #tpu.dot_dimension_numbers<[1], [0], [0], [1], [0, 0, 1, 1], [], []>} : vector<16x128xbf16>, vector<128x128xbf16>, vector<16x128xf32> -> vector<16x128xf32>
    %c1 = arith.constant 1 : index
    %c0_22 = arith.constant 0 : index
    %30 = vector.load %arg9[%c1, %c0_22] : memref<5x128xf32, #tpu.memory_space<vmem>>, vector<1x128xf32>
    %31 = vector.broadcast %30 : vector<1x128xf32> to vector<16x128xf32>
    %32 = arith.addf %29, %31 : vector<16x128xf32>
    %cst_23 = arith.constant 5.000000e-01 : f32
    %33 = vector.broadcast %cst_23 : f32 to vector<16x128xf32>
    %34 = arith.mulf %33, %32 : vector<16x128xf32>
    %cst_24 = arith.constant 4.471500e-02 : f32
    %35 = vector.broadcast %cst_24 : f32 to vector<16x128xf32>
    %36 = arith.mulf %35, %32 : vector<16x128xf32>
    %37 = arith.mulf %36, %32 : vector<16x128xf32>
    %38 = arith.mulf %37, %32 : vector<16x128xf32>
    %39 = arith.addf %32, %38 : vector<16x128xf32>
    %cst_25 = arith.constant 0.797884583 : f32
    %40 = vector.broadcast %cst_25 : f32 to vector<16x128xf32>
    %41 = arith.mulf %40, %39 : vector<16x128xf32>
    %42 = math.tanh %41 : vector<16x128xf32>
    %cst_26 = arith.constant 1.000000e+00 : f32
    %43 = vector.broadcast %cst_26 : f32 to vector<16x128xf32>
    %44 = arith.addf %43, %42 : vector<16x128xf32>
    %45 = arith.mulf %34, %44 : vector<16x128xf32>
    %c0_27 = arith.constant 0 : index
    %c0_28 = arith.constant 0 : index
    %46 = vector.load %arg8[%c0_27, %c0_28] : memref<128x128xbf16, #tpu.memory_space<vmem>>, vector<128x128xbf16>
    %47 = arith.truncf %45 : vector<16x128xf32> to vector<16x128xbf16>
    %cst_29 = arith.constant dense<0.000000e+00> : vector<16x128xf32>
    %48 = tpu.matmul %47, %46, %cst_29 {dimension_numbers = #tpu.dot_dimension_numbers<[1], [0], [0], [1], [0, 0, 1, 1], [], []>} : vector<16x128xbf16>, vector<128x128xbf16>, vector<16x128xf32> -> vector<16x128xf32>
    %c2 = arith.constant 2 : index
    %c0_30 = arith.constant 0 : index
    %49 = vector.load %arg9[%c2, %c0_30] : memref<5x128xf32, #tpu.memory_space<vmem>>, vector<1x128xf32>
    %50 = vector.broadcast %49 : vector<1x128xf32> to vector<16x128xf32>
    %51 = arith.addf %48, %50 : vector<16x128xf32>
    %c0_31 = arith.constant 0 : index
    %c0_32 = arith.constant 0 : index
    %52 = vector.load %arg2[%c0_31, %c0_32] : memref<16x128xbf16, #tpu.memory_space<vmem>>, vector<16x128xbf16>
    %53 = arith.extf %52 : vector<16x128xbf16> to vector<16x128xf32>
    %54 = arith.addf %53, %51 : vector<16x128xf32>
    %c0_33 = arith.constant 0 : index
    %c0_34 = arith.constant 0 : index
    %55 = vector.load %arg10[%c0_33, %c0_34] : memref<128x128xf32, #tpu.memory_space<vmem>>, vector<128x128xf32>
    %cst_35 = arith.constant dense<0.000000e+00> : vector<16x128xf32>
    %56 = tpu.matmul %54, %55, %cst_35 {dimension_numbers = #tpu.dot_dimension_numbers<[1], [0], [0], [1], [0, 0, 1, 1], [], []>} : vector<16x128xf32>, vector<128x128xf32>, vector<16x128xf32> -> vector<16x128xf32>
    %57 = arith.subf %54, %56 : vector<16x128xf32>
    %58 = arith.mulf %57, %57 : vector<16x128xf32>
    %c0_36 = arith.constant 0 : index
    %c0_37 = arith.constant 0 : index
    %59 = vector.load %arg10[%c0_36, %c0_37] : memref<128x128xf32, #tpu.memory_space<vmem>>, vector<128x128xf32>
    %cst_38 = arith.constant dense<0.000000e+00> : vector<16x128xf32>
    %60 = tpu.matmul %58, %59, %cst_38 {dimension_numbers = #tpu.dot_dimension_numbers<[1], [0], [0], [1], [0, 0, 1, 1], [], []>} : vector<16x128xf32>, vector<128x128xf32>, vector<16x128xf32> -> vector<16x128xf32>
    %cst_39 = arith.constant 9.99999974E-6 : f32
    %61 = vector.broadcast %cst_39 : f32 to vector<16x128xf32>
    %62 = arith.addf %60, %61 : vector<16x128xf32>
    %63 = math.rsqrt %62 : vector<16x128xf32>
    %64 = arith.mulf %57, %63 : vector<16x128xf32>
    %c3 = arith.constant 3 : index
    %c0_40 = arith.constant 0 : index
    %65 = vector.load %arg9[%c3, %c0_40] : memref<5x128xf32, #tpu.memory_space<vmem>>, vector<1x128xf32>
    %66 = vector.broadcast %65 : vector<1x128xf32> to vector<16x128xf32>
    %67 = arith.mulf %64, %66 : vector<16x128xf32>
    %c4 = arith.constant 4 : index
    %c0_41 = arith.constant 0 : index
    %68 = vector.load %arg9[%c4, %c0_41] : memref<5x128xf32, #tpu.memory_space<vmem>>, vector<1x128xf32>
    %69 = vector.broadcast %68 : vector<1x128xf32> to vector<16x128xf32>
    %70 = arith.addf %67, %69 : vector<16x128xf32>
    %c0_42 = arith.constant 0 : index
    %c0_43 = arith.constant 0 : index
    %71 = vector.load %arg11[%c0_42, %c0_43] : memref<16x128xf32, #tpu.memory_space<vmem>>, vector<16x128xf32>
    tpu.vector_store %arg11[%c0_42, %c0_43], %70 {strides = array<i32>} : memref<16x128xf32, #tpu.memory_space<vmem>>, vector<16x128xf32>,
    return
  }
  func.func @transform_0(%arg0: i32) -> (i32, i32) {
    %c0_i32 = arith.constant 0 : i32
    %c0_i32_0 = arith.constant 0 : i32
    return %arg0, %c0_i32 : i32, i32
  }
  func.func @transform_1(%arg0: i32) -> (i32, i32) {
    %c0_i32 = arith.constant 0 : i32
    %c0_i32_0 = arith.constant 0 : i32
    return %arg0, %c0_i32 : i32, i32
  }
  func.func @transform_2(%arg0: i32) -> (i32, i32) {
    %c0_i32 = arith.constant 0 : i32
    %c0_i32_0 = arith.constant 0 : i32
    return %arg0, %c0_i32 : i32, i32
  }
  func.func @transform_3(%arg0: i32) -> (i32, i32) {
    %c0_i32 = arith.constant 0 : i32
    %c0_i32_0 = arith.constant 0 : i32
    %c0_i32_1 = arith.constant 0 : i32
    return %c0_i32, %c0_i32_0 : i32, i32
  }
  func.func @transform_4(%arg0: i32) -> (i32, i32) {
    %c0_i32 = arith.constant 0 : i32
    %c0_i32_0 = arith.constant 0 : i32
    %c0_i32_1 = arith.constant 0 : i32
    return %c0_i32, %c0_i32_0 : i32, i32
  }
  func.func @transform_5(%arg0: i32) -> (i32, i32) {
    %c0_i32 = arith.constant 0 : i32
    %c0_i32_0 = arith.constant 0 : i32
    %c0_i32_1 = arith.constant 0 : i32
    return %c0_i32, %c0_i32_0 : i32, i32
  }
  func.func @transform_6(%arg0: i32) -> (i32, i32) {
    %c0_i32 = arith.constant 0 : i32
    %c0_i32_0 = arith.constant 0 : i32
    %c0_i32_1 = arith.constant 0 : i32
    return %c0_i32, %c0_i32_0 : i32, i32
  }
  func.func @transform_7(%arg0: i32) -> (i32, i32) {
    %c0_i32 = arith.constant 0 : i32
    %c0_i32_0 = arith.constant 0 : i32
    %c0_i32_1 = arith.constant 0 : i32
    return %c0_i32, %c0_i32_0 : i32, i32
  }
  func.func @transform_8(%arg0: i32) -> (i32, i32) {
    %c0_i32 = arith.constant 0 : i32
    %c0_i32_0 = arith.constant 0 : i32
    %c0_i32_1 = arith.constant 0 : i32
    return %c0_i32, %c0_i32_0 : i32, i32
  }
  func.func @transform_9(%arg0: i32) -> (i32, i32) {
    %c0_i32 = arith.constant 0 : i32
    %c0_i32_0 = arith.constant 0 : i32
    %c0_i32_1 = arith.constant 0 : i32
    return %c0_i32, %c0_i32_0 : i32, i32
  }
  func.func @transform_10(%arg0: i32) -> (i32, i32) {
    %c0_i32 = arith.constant 0 : i32
    %c0_i32_0 = arith.constant 0 : i32
    return %arg0, %c0_i32 : i32, i32
  }
}

</mosaic_0001>

<llo_original>
// kernel: encoder_layer_forward.3
$region0: #{encoder_layer_forward.3}
  #allocation0 [shape = 'u32[]', space=smem, size = 0x4, offset = 0x4, fixed_abs, tag = 'smem constant byte address 0x4 - core index']
  #allocation1 [shape = 'u32[144,128]{1,0:T(1,128)}', space=vmem, size = 0x12000, scoped, tag = 'internal scratch']
  %s0 = inlined_call_operand.vmem [shape: bf16[16,32], index: 0, kind: input, shape index: {}]
  %s1 = inlined_call_operand.vmem [shape: bf16[16,128], index: 1, kind: input, shape index: {}]
  %s2 = inlined_call_operand.vmem [shape: bf16[16,128], index: 2, kind: input, shape index: {}]
  %s3 = inlined_call_operand.vmem [shape: bf16[128,128], index: 3, kind: input, shape index: {}]
  %s4 = inlined_call_operand.vmem [shape: bf16[128,128], index: 4, kind: input, shape index: {}]
  %s5 = inlined_call_operand.vmem [shape: bf16[32,128], index: 5, kind: input, shape index: {}]
  %s6 = inlined_call_operand.vmem [shape: bf16[128,128], index: 6, kind: input, shape index: {}]
  %s7 = inlined_call_operand.vmem [shape: bf16[128,128], index: 7, kind: input, shape index: {}]
  %s8 = inlined_call_operand.vmem [shape: f32[5,128], index: 8, kind: input, shape index: {}]
  %s9 = inlined_call_operand.vmem [shape: f32[128,128], index: 9, kind: input, shape index: {}]
  %s10 = inlined_call_operand.vmem [shape: f32[16,128], index: 10, kind: output, shape index: {}]
  %s11 = sld [smem:[#allocation0]]
  $region50: #{encoder_layer_forward.3} parent=0
    _
  %s13 = ssub.s32 1, %s11
  %s14 = scalar_select 0, %s13, %s11
  // Predicated region
  $region2: #{encoder_layer_forward.3} parent=0 // pred_check
    _
  $region3: #{encoder_layer_forward.3} parent=0 // pred_check_branch
    %16 = sbr.rel (0) target = $region5
  $region4: #{encoder_layer_forward.3} parent=0 // pred_region
    _
  $region5: #{encoder_layer_forward.3} parent=0 // pred_fallthru
    _
  // Predicated region
  $region6: #{encoder_layer_forward.3} parent=0 // pred_check
    _
  $region7: #{encoder_layer_forward.3} parent=0 // pred_check_branch
    %18 = sbr.rel (0) target = $region9
  $region8: #{encoder_layer_forward.3} parent=0 // pred_region
    _
  $region9: #{encoder_layer_forward.3} parent=0 // pred_fallthru
    _
  // Predicated region
  $region10: #{encoder_layer_forward.3} parent=0 // pred_check
    _
  $region11: #{encoder_layer_forward.3} parent=0 // pred_check_branch
    %20 = sbr.rel (0) target = $region13
  $region12: #{encoder_layer_forward.3} parent=0 // pred_region
    _
  $region13: #{encoder_layer_forward.3} parent=0 // pred_fallthru
    _
  // Predicated region
  $region14: #{encoder_layer_forward.3} parent=0 // pred_check
    _
  $region15: #{encoder_layer_forward.3} parent=0 // pred_check_branch
    %22 = sbr.rel (0) target = $region17
  $region16: #{encoder_layer_forward.3} parent=0 // pred_region
    _
  $region17: #{encoder_layer_forward.3} parent=0 // pred_fallthru
    _
  // Predicated region
  $region18: #{encoder_layer_forward.3} parent=0 // pred_check
    _
  $region19: #{encoder_layer_forward.3} parent=0 // pred_check_branch
    %24 = sbr.rel (0) target = $region21
  $region20: #{encoder_layer_forward.3} parent=0 // pred_region
    _
  $region21: #{encoder_layer_forward.3} parent=0 // pred_fallthru
    _
  // Predicated region
  $region22: #{encoder_layer_forward.3} parent=0 // pred_check
    _
  $region23: #{encoder_layer_forward.3} parent=0 // pred_check_branch
    %26 = sbr.rel (0) target = $region25
  $region24: #{encoder_layer_forward.3} parent=0 // pred_region
    _
  $region25: #{encoder_layer_forward.3} parent=0 // pred_fallthru
    _
  // Predicated region
  $region26: #{encoder_layer_forward.3} parent=0 // pred_check
    _
  $region27: #{encoder_layer_forward.3} parent=0 // pred_check_branch
    %28 = sbr.rel (0) target = $region29
  $region28: #{encoder_layer_forward.3} parent=0 // pred_region
    _
  $region29: #{encoder_layer_forward.3} parent=0 // pred_fallthru
    _
  // Predicated region
  $region30: #{encoder_layer_forward.3} parent=0 // pred_check
    _
  $region31: #{encoder_layer_forward.3} parent=0 // pred_check_branch
    %30 = sbr.rel (0) target = $region33
  $region32: #{encoder_layer_forward.3} parent=0 // pred_region
    _
  $region33: #{encoder_layer_forward.3} parent=0 // pred_fallthru
    _
  // Predicated region
  $region34: #{encoder_layer_forward.3} parent=0 // pred_check
    _
  $region35: #{encoder_layer_forward.3} parent=0 // pred_check_branch
    %32 = sbr.rel (0) target = $region37
  $region36: #{encoder_layer_forward.3} parent=0 // pred_region
    _
  $region37: #{encoder_layer_forward.3} parent=0 // pred_fallthru
    _
  // Predicated region
  $region38: #{encoder_layer_forward.3} parent=0 // pred_check
    _
  $region39: #{encoder_layer_forward.3} parent=0 // pred_check_branch
    %34 = sbr.rel (0) target = $region41
  $region40: #{encoder_layer_forward.3} parent=0 // pred_region
    _
  $region41: #{encoder_layer_forward.3} parent=0 // pred_fallthru
    _
  %v36 = vld [vmem:[%s1] sm:$0xf]
  %v37 = vld [vmem:[%s1 + $0x4] sm:$0xf]
  %v38 = vld [vmem:[%s3] sm:$0xf]
  %v39 = vld [vmem:[%s3 + $0x4] sm:$0xf]
  %v40 = vld [vmem:[%s3 + $0x8] sm:$0xf]
  %v41 = vld [vmem:[%s3 + $0xc] sm:$0xf]
  %v42 = vld [vmem:[%s3 + $0x10] sm:$0xf]
  %v43 = vld [vmem:[%s3 + $0x14] sm:$0xf]
  %v44 = vld [vmem:[%s3 + $0x18] sm:$0xf]
  %v45 = vld [vmem:[%s3 + $0x1c] sm:$0xf]
  %v46 = vld [vmem:[%s3 + $0x20] sm:$0xf]
  %v47 = vld [vmem:[%s3 + $0x24] sm:$0xf]
  %v48 = vld [vmem:[%s3 + $0x28] sm:$0xf]
  %v49 = vld [vmem:[%s3 + $0x2c] sm:$0xf]
  %v50 = vld [vmem:[%s3 + $0x30] sm:$0xf]
  %v51 = vld [vmem:[%s3 + $0x34] sm:$0xf]
  %v52 = vld [vmem:[%s3 + $0x38] sm:$0xf]
  %v53 = vld [vmem:[%s3 + $0x3c] sm:$0xf]
  %v54 = vld [vmem:[%s2] sm:$0xf]
  %v55 = vld [vmem:[%s2 + $0x4] sm:$0xf]
  %v56 = vld [vmem:[%s4] sm:$0xf]
  %v57 = vld [vmem:[%s4 + $0x4] sm:$0xf]
  %v58 = vld [vmem:[%s4 + $0x8] sm:$0xf]
  %v59 = vld [vmem:[%s4 + $0xc] sm:$0xf]
  %v60 = vld [vmem:[%s4 + $0x10] sm:$0xf]
  %v61 = vld [vmem:[%s4 + $0x14] sm:$0xf]
  %v62 = vld [vmem:[%s4 + $0x18] sm:$0xf]
  %v63 = vld [vmem:[%s4 + $0x1c] sm:$0xf]
  %v64 = vld [vmem:[%s4 + $0x20] sm:$0xf]
  %v65 = vld [vmem:[%s4 + $0x24] sm:$0xf]
  %v66 = vld [vmem:[%s4 + $0x28] sm:$0xf]
  %v67 = vld [vmem:[%s4 + $0x2c] sm:$0xf]
  %v68 = vld [vmem:[%s4 + $0x30] sm:$0xf]
  %v69 = vld [vmem:[%s4 + $0x34] sm:$0xf]
  %v70 = vld [vmem:[%s4 + $0x38] sm:$0xf]
  %v71 = vld [vmem:[%s4 + $0x3c] sm:$0xf]
  %v74 = vunpack.c.l.b16 %v54
  %v75 = vunpack.c.l.b16 %v55
  %v76 = vpack.c.b16 %v75, %v74
  %v94 = vunpack.c.l.b16 %v56
  %v95 = vunpack.c.l.b16 %v57
  %v96 = vunpack.c.l.b16 %v58
  %v97 = vunpack.c.l.b16 %v59
  %v98 = vunpack.c.l.b16 %v60
  %v99 = vunpack.c.l.b16 %v61
  %v100 = vunpack.c.l.b16 %v62
  %v101 = vunpack.c.l.b16 %v63
  %v102 = vunpack.c.l.b16 %v64
  %v103 = vunpack.c.l.b16 %v65
  %v104 = vunpack.c.l.b16 %v66
  %v105 = vunpack.c.l.b16 %v67
  %v106 = vunpack.c.l.b16 %v68
  %v107 = vunpack.c.l.b16 %v69
  %v108 = vunpack.c.l.b16 %v70
  %v109 = vunpack.c.l.b16 %v71
  %v110 = vpack.c.b16 %v95, %v94
  %v111 = vpack.c.b16 %v97, %v96
  %v112 = vpack.c.b16 %v99, %v98
  %v113 = vpack.c.b16 %v101, %v100
  %v114 = vpack.c.b16 %v103, %v102
  %v115 = vpack.c.b16 %v105, %v104
  %v116 = vpack.c.b16 %v107, %v106
  %v117 = vpack.c.b16 %v109, %v108
  %126 = vmatprep.subr.bf16.mxu0 0
  %127 = vmatpush1.bf16.msra.mxu0 %v110
  %128 = vmatprep.subr.bf16.mxu0 0
  %129 = vmatpush1.bf16.msra.mxu0 %v111
  %130 = vmatprep.subr.bf16.mxu0 0
  %131 = vmatpush1.bf16.msra.mxu0 %v112
  %132 = vmatprep.subr.bf16.mxu0 0
  %133 = vmatpush1.bf16.msra.mxu0 %v113
  %134 = vmatprep.subr.bf16.mxu0 0
  %135 = vmatpush1.bf16.msra.mxu0 %v114
  %136 = vmatprep.subr.bf16.mxu0 0
  %137 = vmatpush1.bf16.msra.mxu0 %v115
  %138 = vmatprep.subr.bf16.mxu0 0
  %139 = vmatpush1.bf16.msra.mxu0 %v116
  %140 = vmatprep.subr.bf16.mxu0 0
  %141 = vmatpush1.bf16.msra.mxu0 %v117
  %142 = vmatprep.subr.bf16.mxu0 0
  %143 = vmatpush1.bf16.msra.mxu0 0
  %144 = vmatprep.subr.bf16.mxu0 0
  %145 = vmatpush1.bf16.msra.mxu0 0
  %146 = vmatprep.subr.bf16.mxu0 0
  %147 = vmatpush1.bf16.msra.mxu0 0
  %148 = vmatprep.subr.bf16.mxu0 0
  %149 = vmatpush1.bf16.msra.mxu0 0
  %150 = vmatprep.subr.bf16.mxu0 0
  %151 = vmatpush1.bf16.msra.mxu0 0
  %152 = vmatprep.subr.bf16.mxu0 0
  %153 = vmatpush1.bf16.msra.mxu0 0
  %154 = vmatprep.subr.bf16.mxu0 0
  %155 = vmatpush1.bf16.msra.mxu0 0
  %156 = vmatprep.subr.bf16.mxu0 0
  %157 = vmatpush1.bf16.msra.mxu0 0
  %158 = vmatprep.mubr.bf16.mxu0 0
  %159 = vmatmul.mubr.bf16.gmra.mrb[0].mxu0 %v76
  %v160 = vpop.f32.mrb[0].mxu0
  %v161 = vadd.f32 0.0, %v160
  %v162 = vpop.f32.mrb[0].mxu0
  %v163 = vpop.f32.mrb[0].mxu0
  %v164 = vadd.f32 0.0, %v163
  %v165 = vpop.f32.mrb[0].mxu0
  %166 = vdwg.mxu0
  %v169 = vunpack.c.l.b16 %v36
  %v170 = vunpack.c.l.b16 %v37
  %v171 = vpack.c.b16 %v170, %v169
  %v189 = vunpack.c.l.b16 %v38
  %v190 = vunpack.c.l.b16 %v39
  %v191 = vunpack.c.l.b16 %v40
  %v192 = vunpack.c.l.b16 %v41
  %v193 = vunpack.c.l.b16 %v42
  %v194 = vunpack.c.l.b16 %v43
  %v195 = vunpack.c.l.b16 %v44
  %v196 = vunpack.c.l.b16 %v45
  %v197 = vunpack.c.l.b16 %v46
  %v198 = vunpack.c.l.b16 %v47
  %v199 = vunpack.c.l.b16 %v48
  %v200 = vunpack.c.l.b16 %v49
  %v201 = vunpack.c.l.b16 %v50
  %v202 = vunpack.c.l.b16 %v51
  %v203 = vunpack.c.l.b16 %v52
  %v204 = vunpack.c.l.b16 %v53
  %v205 = vpack.c.b16 %v190, %v189
  %v206 = vpack.c.b16 %v192, %v191
  %v207 = vpack.c.b16 %v194, %v193
  %v208 = vpack.c.b16 %v196, %v195
  %v209 = vpack.c.b16 %v198, %v197
  %v210 = vpack.c.b16 %v200, %v199
  %v211 = vpack.c.b16 %v202, %v201
  %v212 = vpack.c.b16 %v204, %v203
  %221 = vmatprep.subr.bf16.mxu0 0
  %222 = vmatpush1.bf16.msra.mxu0 %v205
  %223 = vmatprep.subr.bf16.mxu0 0
  %224 = vmatpush1.bf16.msra.mxu0 %v206
  %225 = vmatprep.subr.bf16.mxu0 0
  %226 = vmatpush1.bf16.msra.mxu0 %v207
  %227 = vmatprep.subr.bf16.mxu0 0
  %228 = vmatpush1.bf16.msra.mxu0 %v208
  %229 = vmatprep.subr.bf16.mxu0 0
  %230 = vmatpush1.bf16.msra.mxu0 %v209
  %231 = vmatprep.subr.bf16.mxu0 0
  %232 = vmatpush1.bf16.msra.mxu0 %v210
  %233 = vmatprep.subr.bf16.mxu0 0
  %234 = vmatpush1.bf16.msra.mxu0 %v211
  %235 = vmatprep.subr.bf16.mxu0 0
  %236 = vmatpush1.bf16.msra.mxu0 %v212
  %237 = vmatprep.subr.bf16.mxu0 0
  %238 = vmatpush1.bf16.msra.mxu0 0
  %239 = vmatprep.subr.bf16.mxu0 0
  %240 = vmatpush1.bf16.msra.mxu0 0
  %241 = vmatprep.subr.bf16.mxu0 0
  %242 = vmatpush1.bf16.msra.mxu0 0
  %243 = vmatprep.subr.bf16.mxu0 0
  %244 = vmatpush1.bf16.msra.mxu0 0
  %245 = vmatprep.subr.bf16.mxu0 0
  %246 = vmatpush1.bf16.msra.mxu0 0
  %247 = vmatprep.subr.bf16.mxu0 0
  %248 = vmatpush1.bf16.msra.mxu0 0
  %249 = vmatprep.subr.bf16.mxu0 0
  %250 = vmatpush1.bf16.msra.mxu0 0
  %251 = vmatprep.subr.bf16.mxu0 0
  %252 = vmatpush1.bf16.msra.mxu0 0
  %253 = vmatprep.mubr.bf16.mxu0 0
  %254 = vmatmul.mubr.bf16.gmra.mrb[0].mxu0 %v171
  %v255 = vpop.f32.mrb[0].mxu0
  %v256 = vadd.f32 %v161, %v255
  %v257 = vpop.f32.mrb[0].mxu0
  %v258 = vpop.f32.mrb[0].mxu0
  %v259 = vadd.f32 %v164, %v258
  %v260 = vpop.f32.mrb[0].mxu0
  %261 = vdwg.mxu0
  %v262 = vld [vmem:[%s0] sm:$0xf]
  %v263 = vld [vmem:[%s0 + $0x4] sm:$0xf]
  %v264 = vld [vmem:[%s5] sm:$0xf]
  %v265 = vld [vmem:[%s5 + $0x4] sm:$0xf]
  %v266 = vld [vmem:[%s5 + $0x8] sm:$0xf]
  %v267 = vld [vmem:[%s5 + $0xc] sm:$0xf]
  %v270 = vunpack.c.l.b16 %v262
  %v271 = vunpack.c.l.b16 %v263
  %v272 = vpack.c.b16 %v271, %v270
  %v277 = vunpack.c.l.b16 %v264
  %v278 = vunpack.c.l.b16 %v265
  %v279 = vunpack.c.l.b16 %v266
  %v280 = vunpack.c.l.b16 %v267
  %v281 = vpack.c.b16 %v278, %v277
  %v282 = vpack.c.b16 %v280, %v279
  %vm285 = vcmask 261120
  %v287 = vsel %vm285, %v272, 0
  %289 = vmatprep.subr.bf16.mxu0 0
  %290 = vmatpush1.bf16.msra.mxu0 %v281
  %291 = vmatprep.subr.bf16.mxu0 0
  %292 = vmatpush1.bf16.msra.mxu0 %v282
  %293 = vmatprep.subr.bf16.mxu0 0
  %294 = vmatpush1.bf16.msra.mxu0 0
  %295 = vmatprep.subr.bf16.mxu0 0
  %296 = vmatpush1.bf16.msra.mxu0 0
  %297 = vmatprep.subr.bf16.mxu0 0
  %298 = vmatpush1.bf16.msra.mxu0 0
  %299 = vmatprep.subr.bf16.mxu0 0
  %300 = vmatpush1.bf16.msra.mxu0 0
  %301 = vmatprep.subr.bf16.mxu0 0
  %302 = vmatpush1.bf16.msra.mxu0 0
  %303 = vmatprep.subr.bf16.mxu0 0
  %304 = vmatpush1.bf16.msra.mxu0 0
  %305 = vmatprep.subr.bf16.mxu0 0
  %306 = vmatpush1.bf16.msra.mxu0 0
  %307 = vmatprep.subr.bf16.mxu0 0
  %308 = vmatpush1.bf16.msra.mxu0 0
  %309 = vmatprep.subr.bf16.mxu0 0
  %310 = vmatpush1.bf16.msra.mxu0 0
  %311 = vmatprep.subr.bf16.mxu0 0
  %312 = vmatpush1.bf16.msra.mxu0 0
  %313 = vmatprep.subr.bf16.mxu0 0
  %314 = vmatpush1.bf16.msra.mxu0 0
  %315 = vmatprep.subr.bf16.mxu0 0
  %316 = vmatpush1.bf16.msra.mxu0 0
  %317 = vmatprep.subr.bf16.mxu0 0
  %318 = vmatpush1.bf16.msra.mxu0 0
  %319 = vmatprep.subr.bf16.mxu0 0
  %320 = vmatpush1.bf16.msra.mxu0 0
  %321 = vmatprep.mubr.bf16.mxu0 0
  %322 = vmatmul.mubr.bf16.gmra.mrb[0].mxu0 %v287
  %v323 = vpop.f32.mrb[0].mxu0
  %v324 = vadd.f32 0.0, %v323
  %v325 = vpop.f32.mrb[0].mxu0
  %v326 = vpop.f32.mrb[0].mxu0
  %v327 = vadd.f32 0.0, %v326
  %v328 = vpop.f32.mrb[0].mxu0
  %329 = vdwg.mxu0
  %v330 = vadd.f32 %v256, %v324
  %v331 = vadd.f32 %v259, %v327
  %v332 = vld [vmem:[%s8] sm:$0x1]
  %v333 = vlaneseq
  %v334 = vshrl.u32 %v333, 7
  %v335 = vsub.s32 0, %v334
  %v336 = vrot.slane %v332, %v335
  %v337 = vadd.f32 %v330, %v336
  %v338 = vadd.f32 %v331, %v336
  %v339 = vmul.f32 %v337, 0.5
  %v340 = vmul.f32 %v338, 0.5
  %v341 = vmul.f32 %v337, 0.044715
  %v342 = vmul.f32 %v338, 0.044715
  %v343 = vmul.f32 %v341, %v337
  %v344 = vmul.f32 %v342, %v338
  %v345 = vmul.f32 %v343, %v337
  %v346 = vmul.f32 %v344, %v338
  %v347 = vadd.f32 %v337, %v345
  %v348 = vadd.f32 %v338, %v346
  %v349 = vmul.f32 %v347, 0.7978846
  %v350 = vmul.f32 %v348, 0.7978846
  %v351 = vtanh.pop %v349
  %v352 = vtanh.pop %v350
  %v353 = vadd.f32 %v351, 1.0
  %v354 = vadd.f32 %v352, 1.0
  %v355 = vmul.f32 %v339, %v353
  %v356 = vmul.f32 %v340, %v354
  %v357 = vld [vmem:[%s6] sm:$0xf]
  %v358 = vld [vmem:[%s6 + $0x4] sm:$0xf]
  %v359 = vld [vmem:[%s6 + $0x8] sm:$0xf]
  %v360 = vld [vmem:[%s6 + $0xc] sm:$0xf]
  %v361 = vld [vmem:[%s6 + $0x10] sm:$0xf]
  %v362 = vld [vmem:[%s6 + $0x14] sm:$0xf]
  %v363 = vld [vmem:[%s6 + $0x18] sm:$0xf]
  %v364 = vld [vmem:[%s6 + $0x1c] sm:$0xf]
  %v365 = vld [vmem:[%s6 + $0x20] sm:$0xf]
  %v366 = vld [vmem:[%s6 + $0x24] sm:$0xf]
  %v367 = vld [vmem:[%s6 + $0x28] sm:$0xf]
  %v368 = vld [vmem:[%s6 + $0x2c] sm:$0xf]
  %v369 = vld [vmem:[%s6 + $0x30] sm:$0xf]
  %v370 = vld [vmem:[%s6 + $0x34] sm:$0xf]
  %v371 = vld [vmem:[%s6 + $0x38] sm:$0xf]
  %v372 = vld [vmem:[%s6 + $0x3c] sm:$0xf]
  %v373 = vpack.c.bf16 %v356, %v355
  %v374 = vld [vmem:[%s8 + $0x1] sm:$0x1]
  %v375 = vlaneseq
  %v376 = vshrl.u32 %v375, 7
  %v377 = vsub.s32 0, %v376
  %v378 = vrot.slane %v374, %v377
  %v395 = vunpack.c.l.b16 %v357
  %v396 = vunpack.c.l.b16 %v358
  %v397 = vunpack.c.l.b16 %v359
  %v398 = vunpack.c.l.b16 %v360
  %v399 = vunpack.c.l.b16 %v361
  %v400 = vunpack.c.l.b16 %v362
  %v401 = vunpack.c.l.b16 %v363
  %v402 = vunpack.c.l.b16 %v364
  %v403 = vunpack.c.l.b16 %v365
  %v404 = vunpack.c.l.b16 %v366
  %v405 = vunpack.c.l.b16 %v367
  %v406 = vunpack.c.l.b16 %v368
  %v407 = vunpack.c.l.b16 %v369
  %v408 = vunpack.c.l.b16 %v370
  %v409 = vunpack.c.l.b16 %v371
  %v410 = vunpack.c.l.b16 %v372
  %v411 = vpack.c.b16 %v396, %v395
  %v412 = vpack.c.b16 %v398, %v397
  %v413 = vpack.c.b16 %v400, %v399
  %v414 = vpack.c.b16 %v402, %v401
  %v415 = vpack.c.b16 %v404, %v403
  %v416 = vpack.c.b16 %v406, %v405
  %v417 = vpack.c.b16 %v408, %v407
  %v418 = vpack.c.b16 %v410, %v409
  %427 = vmatprep.subr.bf16.mxu0 0
  %428 = vmatpush1.bf16.msra.mxu0 %v411
  %429 = vmatprep.subr.bf16.mxu0 0
  %430 = vmatpush1.bf16.msra.mxu0 %v412
  %431 = vmatprep.subr.bf16.mxu0 0
  %432 = vmatpush1.bf16.msra.mxu0 %v413
  %433 = vmatprep.subr.bf16.mxu0 0
  %434 = vmatpush1.bf16.msra.mxu0 %v414
  %435 = vmatprep.subr.bf16.mxu0 0
  %436 = vmatpush1.bf16.msra.mxu0 %v415
  %437 = vmatprep.subr.bf16.mxu0 0
  %438 = vmatpush1.bf16.msra.mxu0 %v416
  %439 = vmatprep.subr.bf16.mxu0 0
  %440 = vmatpush1.bf16.msra.mxu0 %v417
  %441 = vmatprep.subr.bf16.mxu0 0
  %442 = vmatpush1.bf16.msra.mxu0 %v418
  %443 = vmatprep.subr.bf16.mxu0 0
  %444 = vmatpush1.bf16.msra.mxu0 0
  %445 = vmatprep.subr.bf16.mxu0 0
  %446 = vmatpush1.bf16.msra.mxu0 0
  %447 = vmatprep.subr.bf16.mxu0 0
  %448 = vmatpush1.bf16.msra.mxu0 0
  %449 = vmatprep.subr.bf16.mxu0 0
  %450 = vmatpush1.bf16.msra.mxu0 0
  %451 = vmatprep.subr.bf16.mxu0 0
  %452 = vmatpush1.bf16.msra.mxu0 0
  %453 = vmatprep.subr.bf16.mxu0 0
  %454 = vmatpush1.bf16.msra.mxu0 0
  %455 = vmatprep.subr.bf16.mxu0 0
  %456 = vmatpush1.bf16.msra.mxu0 0
  %457 = vmatprep.subr.bf16.mxu0 0
  %458 = vmatpush1.bf16.msra.mxu0 0
  %459 = vmatprep.mubr.bf16.mxu0 0
  %460 = vmatmul.mubr.bf16.gmra.mrb[0].mxu0 %v373
  %v461 = vpop.f32.mrb[0].mxu0
  %v462 = vadd.f32 %v378, %v461
  %v463 = vpop.f32.mrb[0].mxu0
  %v464 = vpop.f32.mrb[0].mxu0
  %v465 = vadd.f32 %v378, %v464
  %v466 = vpop.f32.mrb[0].mxu0
  %467 = vdwg.mxu0
  %v468 = vmul.f32 %v462, 0.5
  %v469 = vmul.f32 %v465, 0.5
  %v470 = vmul.f32 %v462, 0.044715
  %v471 = vmul.f32 %v465, 0.044715
  %v472 = vmul.f32 %v470, %v462
  %v473 = vmul.f32 %v471, %v465
  %v474 = vmul.f32 %v472, %v462
  %v475 = vmul.f32 %v473, %v465
  %v476 = vadd.f32 %v462, %v474
  %v477 = vadd.f32 %v465, %v475
  %v478 = vmul.f32 %v476, 0.7978846
  %v479 = vmul.f32 %v477, 0.7978846
  %v480 = vtanh.pop %v478
  %v481 = vtanh.pop %v479
  %v482 = vadd.f32 %v480, 1.0
  %v483 = vadd.f32 %v481, 1.0
  %v484 = vmul.f32 %v468, %v482
  %v485 = vmul.f32 %v469, %v483
  %v486 = vld [vmem:[%s7] sm:$0xf]
  %v487 = vld [vmem:[%s7 + $0x4] sm:$0xf]
  %v488 = vld [vmem:[%s7 + $0x8] sm:$0xf]
  %v489 = vld [vmem:[%s7 + $0xc] sm:$0xf]
  %v490 = vld [vmem:[%s7 + $0x10] sm:$0xf]
  %v491 = vld [vmem:[%s7 + $0x14] sm:$0xf]
  %v492 = vld [vmem:[%s7 + $0x18] sm:$0xf]
  %v493 = vld [vmem:[%s7 + $0x1c] sm:$0xf]
  %v494 = vld [vmem:[%s7 + $0x20] sm:$0xf]
  %v495 = vld [vmem:[%s7 + $0x24] sm:$0xf]
  %v496 = vld [vmem:[%s7 + $0x28] sm:$0xf]
  %v497 = vld [vmem:[%s7 + $0x2c] sm:$0xf]
  %v498 = vld [vmem:[%s7 + $0x30] sm:$0xf]
  %v499 = vld [vmem:[%s7 + $0x34] sm:$0xf]
  %v500 = vld [vmem:[%s7 + $0x38] sm:$0xf]
  %v501 = vld [vmem:[%s7 + $0x3c] sm:$0xf]
  %v502 = vpack.c.bf16 %v485, %v484
  %v503 = vld [vmem:[%s8 + $0x2] sm:$0x1]
  %v504 = vlaneseq
  %v505 = vshrl.u32 %v504, 7
  %v506 = vsub.s32 0, %v505
  %v507 = vrot.slane %v503, %v506
  %v524 = vunpack.c.l.b16 %v486
  %v525 = vunpack.c.l.b16 %v487
  %v526 = vunpack.c.l.b16 %v488
  %v527 = vunpack.c.l.b16 %v489
  %v528 = vunpack.c.l.b16 %v490
  %v529 = vunpack.c.l.b16 %v491
  %v530 = vunpack.c.l.b16 %v492
  %v531 = vunpack.c.l.b16 %v493
  %v532 = vunpack.c.l.b16 %v494
  %v533 = vunpack.c.l.b16 %v495
  %v534 = vunpack.c.l.b16 %v496
  %v535 = vunpack.c.l.b16 %v497
  %v536 = vunpack.c.l.b16 %v498
  %v537 = vunpack.c.l.b16 %v499
  %v538 = vunpack.c.l.b16 %v500
  %v539 = vunpack.c.l.b16 %v501
  %v540 = vpack.c.b16 %v525, %v524
  %v541 = vpack.c.b16 %v527, %v526
  %v542 = vpack.c.b16 %v529, %v528
  %v543 = vpack.c.b16 %v531, %v530
  %v544 = vpack.c.b16 %v533, %v532
  %v545 = vpack.c.b16 %v535, %v534
  %v546 = vpack.c.b16 %v537, %v536
  %v547 = vpack.c.b16 %v539, %v538
  %556 = vmatprep.subr.bf16.mxu0 0
  %557 = vmatpush1.bf16.msra.mxu0 %v540
  %558 = vmatprep.subr.bf16.mxu0 0
  %559 = vmatpush1.bf16.msra.mxu0 %v541
  %560 = vmatprep.subr.bf16.mxu0 0
  %561 = vmatpush1.bf16.msra.mxu0 %v542
  %562 = vmatprep.subr.bf16.mxu0 0
  %563 = vmatpush1.bf16.msra.mxu0 %v543
  %564 = vmatprep.subr.bf16.mxu0 0
  %565 = vmatpush1.bf16.msra.mxu0 %v544
  %566 = vmatprep.subr.bf16.mxu0 0
  %567 = vmatpush1.bf16.msra.mxu0 %v545
  %568 = vmatprep.subr.bf16.mxu0 0
  %569 = vmatpush1.bf16.msra.mxu0 %v546
  %570 = vmatprep.subr.bf16.mxu0 0
  %571 = vmatpush1.bf16.msra.mxu0 %v547
  %572 = vmatprep.subr.bf16.mxu0 0
  %573 = vmatpush1.bf16.msra.mxu0 0
  %574 = vmatprep.subr.bf16.mxu0 0
  %575 = vmatpush1.bf16.msra.mxu0 0
  %576 = vmatprep.subr.bf16.mxu0 0
  %577 = vmatpush1.bf16.msra.mxu0 0
  %578 = vmatprep.subr.bf16.mxu0 0
  %579 = vmatpush1.bf16.msra.mxu0 0
  %580 = vmatprep.subr.bf16.mxu0 0
  %581 = vmatpush1.bf16.msra.mxu0 0
  %582 = vmatprep.subr.bf16.mxu0 0
  %583 = vmatpush1.bf16.msra.mxu0 0
  %584 = vmatprep.subr.bf16.mxu0 0
  %585 = vmatpush1.bf16.msra.mxu0 0
  %586 = vmatprep.subr.bf16.mxu0 0
  %587 = vmatpush1.bf16.msra.mxu0 0
  %588 = vmatprep.mubr.bf16.mxu0 0
  %589 = vmatmul.mubr.bf16.gmra.mrb[0].mxu0 %v502
  %v590 = vpop.f32.mrb[0].mxu0
  %v591 = vadd.f32 %v507, %v590
  %v592 = vpop.f32.mrb[0].mxu0
  %v593 = vpop.f32.mrb[0].mxu0
  %v594 = vadd.f32 %v507, %v593
  %v595 = vpop.f32.mrb[0].mxu0
  %596 = vdwg.mxu0
  %v597 = vunpack.c.l.bf16 %v36
  %v598 = vunpack.c.l.bf16 %v37
  %v599 = vadd.f32 %v597, %v591
  %v600 = vadd.f32 %v598, %v594
  %v601 = vld [vmem:[%s9] sm:$0xff]
  %v602 = vld [vmem:[%s9 + $0x8] sm:$0xff]
  %v603 = vld [vmem:[%s9 + $0x10] sm:$0xff]
  %v604 = vld [vmem:[%s9 + $0x18] sm:$0xff]
  %v605 = vld [vmem:[%s9 + $0x20] sm:$0xff]
  %v606 = vld [vmem:[%s9 + $0x28] sm:$0xff]
  %v607 = vld [vmem:[%s9 + $0x30] sm:$0xff]
  %v608 = vld [vmem:[%s9 + $0x38] sm:$0xff]
  %v609 = vld [vmem:[%s9 + $0x40] sm:$0xff]
  %v610 = vld [vmem:[%s9 + $0x48] sm:$0xff]
  %v611 = vld [vmem:[%s9 + $0x50] sm:$0xff]
  %v612 = vld [vmem:[%s9 + $0x58] sm:$0xff]
  %v613 = vld [vmem:[%s9 + $0x60] sm:$0xff]
  %v614 = vld [vmem:[%s9 + $0x68] sm:$0xff]
  %v615 = vld [vmem:[%s9 + $0x70] sm:$0xff]
  %v616 = vld [vmem:[%s9 + $0x78] sm:$0xff]
  %617 = vmatprep.subr.mxu0 0.0
  %618 = vmatpush1.msra.mxu0 %v601
  %619 = vmatprep.subr.mxu0 0.0
  %620 = vmatpush1.msra.mxu0 %v602
  %621 = vmatprep.subr.mxu0 0.0
  %622 = vmatpush1.msra.mxu0 %v603
  %623 = vmatprep.subr.mxu0 0.0
  %624 = vmatpush1.msra.mxu0 %v604
  %625 = vmatprep.subr.mxu0 0.0
  %626 = vmatpush1.msra.mxu0 %v605
  %627 = vmatprep.subr.mxu0 0.0
  %628 = vmatpush1.msra.mxu0 %v606
  %629 = vmatprep.subr.mxu0 0.0
  %630 = vmatpush1.msra.mxu0 %v607
  %631 = vmatprep.subr.mxu0 0.0
  %632 = vmatpush1.msra.mxu0 %v608
  %633 = vmatprep.subr.mxu0 0.0
  %634 = vmatpush1.msra.mxu0 %v609
  %635 = vmatprep.subr.mxu0 0.0
  %636 = vmatpush1.msra.mxu0 %v610
  %637 = vmatprep.subr.mxu0 0.0
  %638 = vmatpush1.msra.mxu0 %v611
  %639 = vmatprep.subr.mxu0 0.0
  %640 = vmatpush1.msra.mxu0 %v612
  %641 = vmatprep.subr.mxu0 0.0
  %642 = vmatpush1.msra.mxu0 %v613
  %643 = vmatprep.subr.mxu0 0.0
  %644 = vmatpush1.msra.mxu0 %v614
  %645 = vmatprep.subr.mxu0 0.0
  %646 = vmatpush1.msra.mxu0 %v615
  %647 = vmatprep.subr.mxu0 0.0
  %648 = vmatpush1.msra.mxu0 %v616
  %649 = vmatprep.subr.mxu0 0.0
  %650 = vmatpush1.msra.mxu0 0.0
  %651 = vmatprep.subr.mxu0 0.0
  %652 = vmatpush1.msra.mxu0 0.0
  %653 = vmatprep.subr.mxu0 0.0
  %654 = vmatpush1.msra.mxu0 0.0
  %655 = vmatprep.subr.mxu0 0.0
  %656 = vmatpush1.msra.mxu0 0.0
  %657 = vmatprep.subr.mxu0 0.0
  %658 = vmatpush1.msra.mxu0 0.0
  %659 = vmatprep.subr.mxu0 0.0
  %660 = vmatpush1.msra.mxu0 0.0
  %661 = vmatprep.subr.mxu0 0.0
  %662 = vmatpush1.msra.mxu0 0.0
  %663 = vmatprep.subr.mxu0 0.0
  %664 = vmatpush1.msra.mxu0 0.0
  %665 = vmatprep.subr.mxu0 0.0
  %666 = vmatpush1.msra.mxu0 0.0
  %667 = vmatprep.subr.mxu0 0.0
  %668 = vmatpush1.msra.mxu0 0.0
  %669 = vmatprep.subr.mxu0 0.0
  %670 = vmatpush1.msra.mxu0 0.0
  %671 = vmatprep.subr.mxu0 0.0
  %672 = vmatpush1.msra.mxu0 0.0
  %673 = vmatprep.subr.mxu0 0.0
  %674 = vmatpush1.msra.mxu0 0.0
  %675 = vmatprep.subr.mxu0 0.0
  %676 = vmatpush1.msra.mxu0 0.0
  %677 = vmatprep.subr.mxu0 0.0
  %678 = vmatpush1.msra.mxu0 0.0
  %679 = vmatprep.subr.mxu0 0.0
  %680 = vmatpush1.msra.mxu0 0.0
  %681 = vmatprep.mubr.f32.mxu0 0.0
  %682 = vmatmul.mubr.f32.gmra.mrb[0].mxu0 %v599
  %v683 = vpop.f32.mrb[0].mxu0
  %v684 = vadd.f32 0.0, %v683
  %v685 = vpop.f32.mrb[0].mxu0
  %686 = vmatprep.mubr.f32.mxu0 0.0
  %687 = vmatmul.mubr.f32.gmra.mrb[0].mxu0 %v600
  %v688 = vpop.f32.mrb[0].mxu0
  %v689 = vadd.f32 0.0, %v688
  %v690 = vpop.f32.mrb[0].mxu0
  %691 = vdwg.mxu0
  %v692 = vsub.f32 %v599, %v684
  %v693 = vsub.f32 %v600, %v689
  %v694 = vmul.f32 %v692, %v692
  %v695 = vmul.f32 %v693, %v693
  %696 = vmatprep.subr.mxu0 0.0
  %697 = vmatpush1.msra.mxu0 %v601
  %698 = vmatprep.subr.mxu0 0.0
  %699 = vmatpush1.msra.mxu0 %v602
  %700 = vmatprep.subr.mxu0 0.0
  %701 = vmatpush1.msra.mxu0 %v603
  %702 = vmatprep.subr.mxu0 0.0
  %703 = vmatpush1.msra.mxu0 %v604
  %704 = vmatprep.subr.mxu0 0.0
  %705 = vmatpush1.msra.mxu0 %v605
  %706 = vmatprep.subr.mxu0 0.0
  %707 = vmatpush1.msra.mxu0 %v606
  %708 = vmatprep.subr.mxu0 0.0
  %709 = vmatpush1.msra.mxu0 %v607
  %710 = vmatprep.subr.mxu0 0.0
  %711 = vmatpush1.msra.mxu0 %v608
  %712 = vmatprep.subr.mxu0 0.0
  %713 = vmatpush1.msra.mxu0 %v609
  %714 = vmatprep.subr.mxu0 0.0
  %715 = vmatpush1.msra.mxu0 %v610
  %716 = vmatprep.subr.mxu0 0.0
  %717 = vmatpush1.msra.mxu0 %v611
  %718 = vmatprep.subr.mxu0 0.0
  %719 = vmatpush1.msra.mxu0 %v612
  %720 = vmatprep.subr.mxu0 0.0
  %721 = vmatpush1.msra.mxu0 %v613
  %722 = vmatprep.subr.mxu0 0.0
  %723 = vmatpush1.msra.mxu0 %v614
  %724 = vmatprep.subr.mxu0 0.0
  %725 = vmatpush1.msra.mxu0 %v615
  %726 = vmatprep.subr.mxu0 0.0
  %727 = vmatpush1.msra.mxu0 %v616
  %728 = vmatprep.subr.mxu0 0.0
  %729 = vmatpush1.msra.mxu0 0.0
  %730 = vmatprep.subr.mxu0 0.0
  %731 = vmatpush1.msra.mxu0 0.0
  %732 = vmatprep.subr.mxu0 0.0
  %733 = vmatpush1.msra.mxu0 0.0
  %734 = vmatprep.subr.mxu0 0.0
  %735 = vmatpush1.msra.mxu0 0.0
  %736 = vmatprep.subr.mxu0 0.0
  %737 = vmatpush1.msra.mxu0 0.0
  %738 = vmatprep.subr.mxu0 0.0
  %739 = vmatpush1.msra.mxu0 0.0
  %740 = vmatprep.subr.mxu0 0.0
  %741 = vmatpush1.msra.mxu0 0.0
  %742 = vmatprep.subr.mxu0 0.0
  %743 = vmatpush1.msra.mxu0 0.0
  %744 = vmatprep.subr.mxu0 0.0
  %745 = vmatpush1.msra.mxu0 0.0
  %746 = vmatprep.subr.mxu0 0.0
  %747 = vmatpush1.msra.mxu0 0.0
  %748 = vmatprep.subr.mxu0 0.0
  %749 = vmatpush1.msra.mxu0 0.0
  %750 = vmatprep.subr.mxu0 0.0
  %751 = vmatpush1.msra.mxu0 0.0
  %752 = vmatprep.subr.mxu0 0.0
  %753 = vmatpush1.msra.mxu0 0.0
  %754 = vmatprep.subr.mxu0 0.0
  %755 = vmatpush1.msra.mxu0 0.0
  %756 = vmatprep.subr.mxu0 0.0
  %757 = vmatpush1.msra.mxu0 0.0
  %758 = vmatprep.subr.mxu0 0.0
  %759 = vmatpush1.msra.mxu0 0.0
  %760 = vmatprep.mubr.f32.mxu0 0.0
  %761 = vmatmul.mubr.f32.gmra.mrb[0].mxu0 %v694
  %v762 = vpop.f32.mrb[0].mxu0
  %v763 = vadd.f32 1e-05, %v762
  %v764 = vpop.f32.mrb[0].mxu0
  %765 = vmatprep.mubr.f32.mxu0 0.0
  %766 = vmatmul.mubr.f32.gmra.mrb[0].mxu0 %v695
  %v767 = vpop.f32.mrb[0].mxu0
  %v768 = vadd.f32 1e-05, %v767
  %v769 = vpop.f32.mrb[0].mxu0
  %770 = vdwg.mxu0
  %v771 = vrsqrt.pop %v763
  %v772 = vrsqrt.pop %v768
  %v773 = vmul.f32 %v692, %v771
  %v774 = vmul.f32 %v693, %v772
  %v775 = vld [vmem:[%s8 + $0x3] sm:$0x1]
  %v776 = vlaneseq
  %v777 = vshrl.u32 %v776, 7
  %v778 = vsub.s32 0, %v777
  %v779 = vrot.slane %v775, %v778
  %v780 = vmul.f32 %v773, %v779
  %v781 = vmul.f32 %v774, %v779
  %v782 = vld [vmem:[%s8 + $0x4] sm:$0x1]
  %v783 = vlaneseq
  %v784 = vshrl.u32 %v783, 7
  %v785 = vsub.s32 0, %v784
  %v786 = vrot.slane %v782, %v785
  %v787 = vadd.f32 %v780, %v786
  %v788 = vadd.f32 %v781, %v786
  %789 = vst [vmem:[%s10] sm:$0xff] %v787
  %790 = vst [vmem:[%s10 + $0x8] sm:$0xff] %v788
  // Predicated region
  $region42: #{encoder_layer_forward.3} parent=0 // pred_check
    _
  $region43: #{encoder_layer_forward.3} parent=0 // pred_check_branch
    %792 = sbr.rel (0) target = $region45
  $region44: #{encoder_layer_forward.3} parent=0 // pred_region
    _
  $region45: #{encoder_layer_forward.3} parent=0 // pred_fallthru
    _
  // Predicated region
  $region46: #{encoder_layer_forward.3} parent=0 // pred_check
    _
  $region47: #{encoder_layer_forward.3} parent=0 // pred_check_branch
    %794 = sbr.rel (0) target = $region49
  $region48: #{encoder_layer_forward.3} parent=0 // pred_region
    _
  $region49: #{encoder_layer_forward.3} parent=0 // pred_fallthru
    _

// kernel: encoder_layer_forward.2
$region0: #{encoder_layer_forward.2}
  #allocation0 [shape = 'u32[]', space=smem, size = 0x4, offset = 0x4, fixed_abs, tag = 'smem constant byte address 0x4 - core index']
  #allocation1 [shape = 'u32[144,128]{1,0:T(1,128)}', space=vmem, size = 0x12000, scoped, tag = 'internal scratch']
  %s0 = inlined_call_operand.vmem [shape: bf16[16,32], index: 0, kind: input, shape index: {}]
  %s1 = inlined_call_operand.vmem [shape: bf16[16,128], index: 1, kind: input, shape index: {}]
  %s2 = inlined_call_operand.vmem [shape: bf16[16,128], index: 2, kind: input, shape index: {}]
  %s3 = inlined_call_operand.vmem [shape: f32[16,8], index: 3, kind: input, shape index: {}]
  %s4 = inlined_call_operand.vmem [shape: f32[16,1], index: 4, kind: input, shape index: {}]
  %s5 = inlined_call_operand.vmem [shape: bf16[128,128], index: 5, kind: input, shape index: {}]
  %s6 = inlined_call_operand.vmem [shape: bf16[128,128], index: 6, kind: input, shape index: {}]
  %s7 = inlined_call_operand.vmem [shape: bf16[32,128], index: 7, kind: input, shape index: {}]
  %s8 = inlined_call_operand.vmem [shape: bf16[128,128], index: 8, kind: input, shape index: {}]
  %s9 = inlined_call_operand.vmem [shape: bf16[128,128], index: 9, kind: input, shape index: {}]
  %s10 = inlined_call_operand.vmem [shape: bf16[32,128], index: 10, kind: input, shape index: {}]
  %s11 = inlined_call_operand.vmem [shape: bf16[128,32], index: 11, kind: input, shape index: {}]
  %s12 = inlined_call_operand.vmem [shape: f32[3,128], index: 12, kind: input, shape index: {}]
  %s13 = inlined_call_operand.vmem [shape: f32[1,128], index: 13, kind: input, shape index: {}]
  %s14 = inlined_call_operand.vmem [shape: f32[5,32], index: 14, kind: input, shape index: {}]
  %s15 = inlined_call_operand.vmem [shape: f32[8,128], index: 15, kind: input, shape index: {}]
  %s16 = inlined_call_operand.vmem [shape: f32[128,32], index: 16, kind: input, shape index: {}]
  %s17 = inlined_call_operand.vmem [shape: f32[16,32], index: 17, kind: output, shape index: {}]
  %s18 = sld [smem:[#allocation0]]
  $region78: #{encoder_layer_forward.2} parent=0
    _
  %s20 = ssub.s32 1, %s18
  %s21 = scalar_select 0, %s20, %s18
  // Predicated region
  $region2: #{encoder_layer_forward.2} parent=0 // pred_check
    _
  $region3: #{encoder_layer_forward.2} parent=0 // pred_check_branch
    %23 = sbr.rel (0) target = $region5
  $region4: #{encoder_layer_forward.2} parent=0 // pred_region
    _
  $region5: #{encoder_layer_forward.2} parent=0 // pred_fallthru
    _
  // Predicated region
  $region6: #{encoder_layer_forward.2} parent=0 // pred_check
    _
  $region7: #{encoder_layer_forward.2} parent=0 // pred_check_branch
    %25 = sbr.rel (0) target = $region9
  $region8: #{encoder_layer_forward.2} parent=0 // pred_region
    _
  $region9: #{encoder_layer_forward.2} parent=0 // pred_fallthru
    _
  // Predicated region
  $region10: #{encoder_layer_forward.2} parent=0 // pred_check
    _
  $region11: #{encoder_layer_forward.2} parent=0 // pred_check_branch
    %27 = sbr.rel (0) target = $region13
  $region12: #{encoder_layer_forward.2} parent=0 // pred_region
    _
  $region13: #{encoder_layer_forward.2} parent=0 // pred_fallthru
    _
  // Predicated region
  $region14: #{encoder_layer_forward.2} parent=0 // pred_check
    _
  $region15: #{encoder_layer_forward.2} parent=0 // pred_check_branch
    %29 = sbr.rel (0) target = $region17
  $region16: #{encoder_layer_forward.2} parent=0 // pred_region
    _
  $region17: #{encoder_layer_forward.2} parent=0 // pred_fallthru
    _
  // Predicated region
  $region18: #{encoder_layer_forward.2} parent=0 // pred_check
    _
  $region19: #{encoder_layer_forward.2} parent=0 // pred_check_branch
    %31 = sbr.rel (0) target = $region21
  $region20: #{encoder_layer_forward.2} parent=0 // pred_region
    _
  $region21: #{encoder_layer_forward.2} parent=0 // pred_fallthru
    _
  // Predicated region
  $region22: #{encoder_layer_forward.2} parent=0 // pred_check
    _
  $region23: #{encoder_layer_forward.2} parent=0 // pred_check_branch
    %33 = sbr.rel (0) target = $region25
  $region24: #{encoder_layer_forward.2} parent=0 // pred_region
    _
  $region25: #{encoder_layer_forward.2} parent=0 // pred_fallthru
    _
  // Predicated region
  $region26: #{encoder_layer_forward.2} parent=0 // pred_check
    _
  $region27: #{encoder_layer_forward.2} parent=0 // pred_check_branch
    %35 = sbr.rel (0) target = $region29
  $region28: #{encoder_layer_forward.2} parent=0 // pred_region
    _
  $region29: #{encoder_layer_forward.2} parent=0 // pred_fallthru
    _
  // Predicated region
  $region30: #{encoder_layer_forward.2} parent=0 // pred_check
    _
  $region31: #{encoder_layer_forward.2} parent=0 // pred_check_branch
    %37 = sbr.rel (0) target = $region33
  $region32: #{encoder_layer_forward.2} parent=0 // pred_region
    _
  $region33: #{encoder_layer_forward.2} parent=0 // pred_fallthru
    _
  // Predicated region
  $region34: #{encoder_layer_forward.2} parent=0 // pred_check
    _
  $region35: #{encoder_layer_forward.2} parent=0 // pred_check_branch
    %39 = sbr.rel (0) target = $region37
  $region36: #{encoder_layer_forward.2} parent=0 // pred_region
    _
  $region37: #{encoder_layer_forward.2} parent=0 // pred_fallthru
    _
  // Predicated region
  $region38: #{encoder_layer_forward.2} parent=0 // pred_check
    _
  $region39: #{encoder_layer_forward.2} parent=0 // pred_check_branch
    %41 = sbr.rel (0) target = $region41
  $region40: #{encoder_layer_forward.2} parent=0 // pred_region
    _
  $region41: #{encoder_layer_forward.2} parent=0 // pred_fallthru
    _
  // Predicated region
  $region42: #{encoder_layer_forward.2} parent=0 // pred_check
    _
  $region43: #{encoder_layer_forward.2} parent=0 // pred_check_branch
    %43 = sbr.rel (0) target = $region45
  $region44: #{encoder_layer_forward.2} parent=0 // pred_region
    _
  $region45: #{encoder_layer_forward.2} parent=0 // pred_fallthru
    _
  // Predicated region
  $region46: #{encoder_layer_forward.2} parent=0 // pred_check
    _
  $region47: #{encoder_layer_forward.2} parent=0 // pred_check_branch
    %45 = sbr.rel (0) target = $region49
  $region48: #{encoder_layer_forward.2} parent=0 // pred_region
    _
  $region49: #{encoder_layer_forward.2} parent=0 // pred_fallthru
    _
  // Predicated region
  $region50: #{encoder_layer_forward.2} parent=0 // pred_check
    _
  $region51: #{encoder_layer_forward.2} parent=0 // pred_check_branch
    %47 = sbr.rel (0) target = $region53
  $region52: #{encoder_layer_forward.2} parent=0 // pred_region
    _
  $region53: #{encoder_layer_forward.2} parent=0 // pred_fallthru
    _
  // Predicated region
  $region54: #{encoder_layer_forward.2} parent=0 // pred_check
    _
  $region55: #{encoder_layer_forward.2} parent=0 // pred_check_branch
    %49 = sbr.rel (0) target = $region57
  $region56: #{encoder_layer_forward.2} parent=0 // pred_region
    _
  $region57: #{encoder_layer_forward.2} parent=0 // pred_fallthru
    _
  // Predicated region
  $region58: #{encoder_layer_forward.2} parent=0 // pred_check
    _
  $region59: #{encoder_layer_forward.2} parent=0 // pred_check_branch
    %51 = sbr.rel (0) target = $region61
  $region60: #{encoder_layer_forward.2} parent=0 // pred_region
    _
  $region61: #{encoder_layer_forward.2} parent=0 // pred_fallthru
    _
  // Predicated region
  $region62: #{encoder_layer_forward.2} parent=0 // pred_check
    _
  $region63: #{encoder_layer_forward.2} parent=0 // pred_check_branch
    %53 = sbr.rel (0) target = $region65
  $region64: #{encoder_layer_forward.2} parent=0 // pred_region
    _
  $region65: #{encoder_layer_forward.2} parent=0 // pred_fallthru
    _
  // Predicated region
  $region66: #{encoder_layer_forward.2} parent=0 // pred_check
    _
  $region67: #{encoder_layer_forward.2} parent=0 // pred_check_branch
    %55 = sbr.rel (0) target = $region69
  $region68: #{encoder_layer_forward.2} parent=0 // pred_region
    _
  $region69: #{encoder_layer_forward.2} parent=0 // pred_fallthru
    _
  %v57 = vld [vmem:[%s1] sm:$0xf]
  %v58 = vld [vmem:[%s1 + $0x4] sm:$0xf]
  %v59 = vld [vmem:[%s5] sm:$0xf]
  %v60 = vld [vmem:[%s5 + $0x4] sm:$0xf]
  %v61 = vld [vmem:[%s5 + $0x8] sm:$0xf]
  %v62 = vld [vmem:[%s5 + $0xc] sm:$0xf]
  %v63 = vld [vmem:[%s5 + $0x10] sm:$0xf]
  %v64 = vld [vmem:[%s5 + $0x14] sm:$0xf]
  %v65 = vld [vmem:[%s5 + $0x18] sm:$0xf]
  %v66 = vld [vmem:[%s5 + $0x1c] sm:$0xf]
  %v67 = vld [vmem:[%s5 + $0x20] sm:$0xf]
  %v68 = vld [vmem:[%s5 + $0x24] sm:$0xf]
  %v69 = vld [vmem:[%s5 + $0x28] sm:$0xf]
  %v70 = vld [vmem:[%s5 + $0x2c] sm:$0xf]
  %v71 = vld [vmem:[%s5 + $0x30] sm:$0xf]
  %v72 = vld [vmem:[%s5 + $0x34] sm:$0xf]
  %v73 = vld [vmem:[%s5 + $0x38] sm:$0xf]
  %v74 = vld [vmem:[%s5 + $0x3c] sm:$0xf]
  %v75 = vld [vmem:[%s2] sm:$0xf]
  %v76 = vld [vmem:[%s2 + $0x4] sm:$0xf]
  %v77 = vld [vmem:[%s6] sm:$0xf]
  %v78 = vld [vmem:[%s6 + $0x4] sm:$0xf]
  %v79 = vld [vmem:[%s6 + $0x8] sm:$0xf]
  %v80 = vld [vmem:[%s6 + $0xc] sm:$0xf]
  %v81 = vld [vmem:[%s6 + $0x10] sm:$0xf]
  %v82 = vld [vmem:[%s6 + $0x14] sm:$0xf]
  %v83 = vld [vmem:[%s6 + $0x18] sm:$0xf]
  %v84 = vld [vmem:[%s6 + $0x1c] sm:$0xf]
  %v85 = vld [vmem:[%s6 + $0x20] sm:$0xf]
  %v86 = vld [vmem:[%s6 + $0x24] sm:$0xf]
  %v87 = vld [vmem:[%s6 + $0x28] sm:$0xf]
  %v88 = vld [vmem:[%s6 + $0x2c] sm:$0xf]
  %v89 = vld [vmem:[%s6 + $0x30] sm:$0xf]
  %v90 = vld [vmem:[%s6 + $0x34] sm:$0xf]
  %v91 = vld [vmem:[%s6 + $0x38] sm:$0xf]
  %v92 = vld [vmem:[%s6 + $0x3c] sm:$0xf]
  %v95 = vunpack.c.l.b16 %v75
  %v96 = vunpack.c.l.b16 %v76
  %v97 = vpack.c.b16 %v96, %v95
  %v115 = vunpack.c.l.b16 %v77
  %v116 = vunpack.c.l.b16 %v78
  %v117 = vunpack.c.l.b16 %v79
  %v118 = vunpack.c.l.b16 %v80
  %v119 = vunpack.c.l.b16 %v81
  %v120 = vunpack.c.l.b16 %v82
  %v121 = vunpack.c.l.b16 %v83
  %v122 = vunpack.c.l.b16 %v84
  %v123 = vunpack.c.l.b16 %v85
  %v124 = vunpack.c.l.b16 %v86
  %v125 = vunpack.c.l.b16 %v87
  %v126 = vunpack.c.l.b16 %v88
  %v127 = vunpack.c.l.b16 %v89
  %v128 = vunpack.c.l.b16 %v90
  %v129 = vunpack.c.l.b16 %v91
  %v130 = vunpack.c.l.b16 %v92
  %v131 = vpack.c.b16 %v116, %v115
  %v132 = vpack.c.b16 %v118, %v117
  %v133 = vpack.c.b16 %v120, %v119
  %v134 = vpack.c.b16 %v122, %v121
  %v135 = vpack.c.b16 %v124, %v123
  %v136 = vpack.c.b16 %v126, %v125
  %v137 = vpack.c.b16 %v128, %v127
  %v138 = vpack.c.b16 %v130, %v129
  %147 = vmatprep.subr.bf16.mxu0 0
  %148 = vmatpush1.bf16.msra.mxu0 %v131
  %149 = vmatprep.subr.bf16.mxu0 0
  %150 = vmatpush1.bf16.msra.mxu0 %v132
  %151 = vmatprep.subr.bf16.mxu0 0
  %152 = vmatpush1.bf16.msra.mxu0 %v133
  %153 = vmatprep.subr.bf16.mxu0 0
  %154 = vmatpush1.bf16.msra.mxu0 %v134
  %155 = vmatprep.subr.bf16.mxu0 0
  %156 = vmatpush1.bf16.msra.mxu0 %v135
  %157 = vmatprep.subr.bf16.mxu0 0
  %158 = vmatpush1.bf16.msra.mxu0 %v136
  %159 = vmatprep.subr.bf16.mxu0 0
  %160 = vmatpush1.bf16.msra.mxu0 %v137
  %161 = vmatprep.subr.bf16.mxu0 0
  %162 = vmatpush1.bf16.msra.mxu0 %v138
  %163 = vmatprep.subr.bf16.mxu0 0
  %164 = vmatpush1.bf16.msra.mxu0 0
  %165 = vmatprep.subr.bf16.mxu0 0
  %166 = vmatpush1.bf16.msra.mxu0 0
  %167 = vmatprep.subr.bf16.mxu0 0
  %168 = vmatpush1.bf16.msra.mxu0 0
  %169 = vmatprep.subr.bf16.mxu0 0
  %170 = vmatpush1.bf16.msra.mxu0 0
  %171 = vmatprep.subr.bf16.mxu0 0
  %172 = vmatpush1.bf16.msra.mxu0 0
  %173 = vmatprep.subr.bf16.mxu0 0
  %174 = vmatpush1.bf16.msra.mxu0 0
  %175 = vmatprep.subr.bf16.mxu0 0
  %176 = vmatpush1.bf16.msra.mxu0 0
  %177 = vmatprep.subr.bf16.mxu0 0
  %178 = vmatpush1.bf16.msra.mxu0 0
  %179 = vmatprep.mubr.bf16.mxu0 0
  %180 = vmatmul.mubr.bf16.gmra.mrb[0].mxu0 %v97
  %v181 = vpop.f32.mrb[0].mxu0
  %v182 = vadd.f32 0.0, %v181
  %v183 = vpop.f32.mrb[0].mxu0
  %v184 = vpop.f32.mrb[0].mxu0
  %v185 = vadd.f32 0.0, %v184
  %v186 = vpop.f32.mrb[0].mxu0
  %187 = vdwg.mxu0
  %v190 = vunpack.c.l.b16 %v57
  %v191 = vunpack.c.l.b16 %v58
  %v192 = vpack.c.b16 %v191, %v190
  %v210 = vunpack.c.l.b16 %v59
  %v211 = vunpack.c.l.b16 %v60
  %v212 = vunpack.c.l.b16 %v61
  %v213 = vunpack.c.l.b16 %v62
  %v214 = vunpack.c.l.b16 %v63
  %v215 = vunpack.c.l.b16 %v64
  %v216 = vunpack.c.l.b16 %v65
  %v217 = vunpack.c.l.b16 %v66
  %v218 = vunpack.c.l.b16 %v67
  %v219 = vunpack.c.l.b16 %v68
  %v220 = vunpack.c.l.b16 %v69
  %v221 = vunpack.c.l.b16 %v70
  %v222 = vunpack.c.l.b16 %v71
  %v223 = vunpack.c.l.b16 %v72
  %v224 = vunpack.c.l.b16 %v73
  %v225 = vunpack.c.l.b16 %v74
  %v226 = vpack.c.b16 %v211, %v210
  %v227 = vpack.c.b16 %v213, %v212
  %v228 = vpack.c.b16 %v215, %v214
  %v229 = vpack.c.b16 %v217, %v216
  %v230 = vpack.c.b16 %v219, %v218
  %v231 = vpack.c.b16 %v221, %v220
  %v232 = vpack.c.b16 %v223, %v222
  %v233 = vpack.c.b16 %v225, %v224
  %242 = vmatprep.subr.bf16.mxu0 0
  %243 = vmatpush1.bf16.msra.mxu0 %v226
  %244 = vmatprep.subr.bf16.mxu0 0
  %245 = vmatpush1.bf16.msra.mxu0 %v227
  %246 = vmatprep.subr.bf16.mxu0 0
  %247 = vmatpush1.bf16.msra.mxu0 %v228
  %248 = vmatprep.subr.bf16.mxu0 0
  %249 = vmatpush1.bf16.msra.mxu0 %v229
  %250 = vmatprep.subr.bf16.mxu0 0
  %251 = vmatpush1.bf16.msra.mxu0 %v230
  %252 = vmatprep.subr.bf16.mxu0 0
  %253 = vmatpush1.bf16.msra.mxu0 %v231
  %254 = vmatprep.subr.bf16.mxu0 0
  %255 = vmatpush1.bf16.msra.mxu0 %v232
  %256 = vmatprep.subr.bf16.mxu0 0
  %257 = vmatpush1.bf16.msra.mxu0 %v233
  %258 = vmatprep.subr.bf16.mxu0 0
  %259 = vmatpush1.bf16.msra.mxu0 0
  %260 = vmatprep.subr.bf16.mxu0 0
  %261 = vmatpush1.bf16.msra.mxu0 0
  %262 = vmatprep.subr.bf16.mxu0 0
  %263 = vmatpush1.bf16.msra.mxu0 0
  %264 = vmatprep.subr.bf16.mxu0 0
  %265 = vmatpush1.bf16.msra.mxu0 0
  %266 = vmatprep.subr.bf16.mxu0 0
  %267 = vmatpush1.bf16.msra.mxu0 0
  %268 = vmatprep.subr.bf16.mxu0 0
  %269 = vmatpush1.bf16.msra.mxu0 0
  %270 = vmatprep.subr.bf16.mxu0 0
  %271 = vmatpush1.bf16.msra.mxu0 0
  %272 = vmatprep.subr.bf16.mxu0 0
  %273 = vmatpush1.bf16.msra.mxu0 0
  %274 = vmatprep.mubr.bf16.mxu0 0
  %275 = vmatmul.mubr.bf16.gmra.mrb[0].mxu0 %v192
  %v276 = vpop.f32.mrb[0].mxu0
  %v277 = vadd.f32 %v182, %v276
  %v278 = vpop.f32.mrb[0].mxu0
  %v279 = vpop.f32.mrb[0].mxu0
  %v280 = vadd.f32 %v185, %v279
  %v281 = vpop.f32.mrb[0].mxu0
  %282 = vdwg.mxu0
  %v283 = vld [vmem:[%s0] sm:$0xf]
  %v284 = vld [vmem:[%s0 + $0x4] sm:$0xf]
  %v285 = vld [vmem:[%s7] sm:$0xf]
  %v286 = vld [vmem:[%s7 + $0x4] sm:$0xf]
  %v287 = vld [vmem:[%s7 + $0x8] sm:$0xf]
  %v288 = vld [vmem:[%s7 + $0xc] sm:$0xf]
  %v291 = vunpack.c.l.b16 %v283
  %v292 = vunpack.c.l.b16 %v284
  %v293 = vpack.c.b16 %v292, %v291
  %v298 = vunpack.c.l.b16 %v285
  %v299 = vunpack.c.l.b16 %v286
  %v300 = vunpack.c.l.b16 %v287
  %v301 = vunpack.c.l.b16 %v288
  %v302 = vpack.c.b16 %v299, %v298
  %v303 = vpack.c.b16 %v301, %v300
  %vm306 = vcmask 261120
  %v308 = vsel %vm306, %v293, 0
  %310 = vmatprep.subr.bf16.mxu0 0
  %311 = vmatpush1.bf16.msra.mxu0 %v302
  %312 = vmatprep.subr.bf16.mxu0 0
  %313 = vmatpush1.bf16.msra.mxu0 %v303
  %314 = vmatprep.subr.bf16.mxu0 0
  %315 = vmatpush1.bf16.msra.mxu0 0
  %316 = vmatprep.subr.bf16.mxu0 0
  %317 = vmatpush1.bf16.msra.mxu0 0
  %318 = vmatprep.subr.bf16.mxu0 0
  %319 = vmatpush1.bf16.msra.mxu0 0
  %320 = vmatprep.subr.bf16.mxu0 0
  %321 = vmatpush1.bf16.msra.mxu0 0
  %322 = vmatprep.subr.bf16.mxu0 0
  %323 = vmatpush1.bf16.msra.mxu0 0
  %324 = vmatprep.subr.bf16.mxu0 0
  %325 = vmatpush1.bf16.msra.mxu0 0
  %326 = vmatprep.subr.bf16.mxu0 0
  %327 = vmatpush1.bf16.msra.mxu0 0
  %328 = vmatprep.subr.bf16.mxu0 0
  %329 = vmatpush1.bf16.msra.mxu0 0
  %330 = vmatprep.subr.bf16.mxu0 0
  %331 = vmatpush1.bf16.msra.mxu0 0
  %332 = vmatprep.subr.bf16.mxu0 0
  %333 = vmatpush1.bf16.msra.mxu0 0
  %334 = vmatprep.subr.bf16.mxu0 0
  %335 = vmatpush1.bf16.msra.mxu0 0
  %336 = vmatprep.subr.bf16.mxu0 0
  %337 = vmatpush1.bf16.msra.mxu0 0
  %338 = vmatprep.subr.bf16.mxu0 0
  %339 = vmatpush1.bf16.msra.mxu0 0
  %340 = vmatprep.subr.bf16.mxu0 0
  %341 = vmatpush1.bf16.msra.mxu0 0
  %342 = vmatprep.mubr.bf16.mxu0 0
  %343 = vmatmul.mubr.bf16.gmra.mrb[0].mxu0 %v308
  %v344 = vpop.f32.mrb[0].mxu0
  %v345 = vadd.f32 0.0, %v344
  %v346 = vpop.f32.mrb[0].mxu0
  %v347 = vpop.f32.mrb[0].mxu0
  %v348 = vadd.f32 0.0, %v347
  %v349 = vpop.f32.mrb[0].mxu0
  %350 = vdwg.mxu0
  %v351 = vadd.f32 %v277, %v345
  %v352 = vadd.f32 %v280, %v348
  %v353 = vld [vmem:[%s12] sm:$0x1]
  %v354 = vlaneseq
  %v355 = vshrl.u32 %v354, 7
  %v356 = vsub.s32 0, %v355
  %v357 = vrot.slane %v353, %v356
  %v358 = vadd.f32 %v351, %v357
  %v359 = vadd.f32 %v352, %v357
  %v360 = vmul.f32 %v358, 0.5
  %v361 = vmul.f32 %v359, 0.5
  %v362 = vmul.f32 %v358, 0.044715
  %v363 = vmul.f32 %v359, 0.044715
  %v364 = vmul.f32 %v362, %v358
  %v365 = vmul.f32 %v363, %v359
  %v366 = vmul.f32 %v364, %v358
  %v367 = vmul.f32 %v365, %v359
  %v368 = vadd.f32 %v358, %v366
  %v369 = vadd.f32 %v359, %v367
  %v370 = vmul.f32 %v368, 0.7978846
  %v371 = vmul.f32 %v369, 0.7978846
  %v372 = vtanh.pop %v370
  %v373 = vtanh.pop %v371
  %v374 = vadd.f32 %v372, 1.0
  %v375 = vadd.f32 %v373, 1.0
  %v376 = vmul.f32 %v360, %v374
  %v377 = vmul.f32 %v361, %v375
  %v378 = vld [vmem:[%s8] sm:$0xf]
  %v379 = vld [vmem:[%s8 + $0x4] sm:$0xf]
  %v380 = vld [vmem:[%s8 + $0x8] sm:$0xf]
  %v381 = vld [vmem:[%s8 + $0xc] sm:$0xf]
  %v382 = vld [vmem:[%s8 + $0x10] sm:$0xf]
  %v383 = vld [vmem:[%s8 + $0x14] sm:$0xf]
  %v384 = vld [vmem:[%s8 + $0x18] sm:$0xf]
  %v385 = vld [vmem:[%s8 + $0x1c] sm:$0xf]
  %v386 = vld [vmem:[%s8 + $0x20] sm:$0xf]
  %v387 = vld [vmem:[%s8 + $0x24] sm:$0xf]
  %v388 = vld [vmem:[%s8 + $0x28] sm:$0xf]
  %v389 = vld [vmem:[%s8 + $0x2c] sm:$0xf]
  %v390 = vld [vmem:[%s8 + $0x30] sm:$0xf]
  %v391 = vld [vmem:[%s8 + $0x34] sm:$0xf]
  %v392 = vld [vmem:[%s8 + $0x38] sm:$0xf]
  %v393 = vld [vmem:[%s8 + $0x3c] sm:$0xf]
  %v394 = vpack.c.bf16 %v377, %v376
  %v395 = vld [vmem:[%s12 + $0x1] sm:$0x1]
  %v396 = vlaneseq
  %v397 = vshrl.u32 %v396, 7
  %v398 = vsub.s32 0, %v397
  %v399 = vrot.slane %v395, %v398
  %v416 = vunpack.c.l.b16 %v378
  %v417 = vunpack.c.l.b16 %v379
  %v418 = vunpack.c.l.b16 %v380
  %v419 = vunpack.c.l.b16 %v381
  %v420 = vunpack.c.l.b16 %v382
  %v421 = vunpack.c.l.b16 %v383
  %v422 = vunpack.c.l.b16 %v384
  %v423 = vunpack.c.l.b16 %v385
  %v424 = vunpack.c.l.b16 %v386
  %v425 = vunpack.c.l.b16 %v387
  %v426 = vunpack.c.l.b16 %v388
  %v427 = vunpack.c.l.b16 %v389
  %v428 = vunpack.c.l.b16 %v390
  %v429 = vunpack.c.l.b16 %v391
  %v430 = vunpack.c.l.b16 %v392
  %v431 = vunpack.c.l.b16 %v393
  %v432 = vpack.c.b16 %v417, %v416
  %v433 = vpack.c.b16 %v419, %v418
  %v434 = vpack.c.b16 %v421, %v420
  %v435 = vpack.c.b16 %v423, %v422
  %v436 = vpack.c.b16 %v425, %v424
  %v437 = vpack.c.b16 %v427, %v426
  %v438 = vpack.c.b16 %v429, %v428
  %v439 = vpack.c.b16 %v431, %v430
  %448 = vmatprep.subr.bf16.mxu0 0
  %449 = vmatpush1.bf16.msra.mxu0 %v432
  %450 = vmatprep.subr.bf16.mxu0 0
  %451 = vmatpush1.bf16.msra.mxu0 %v433
  %452 = vmatprep.subr.bf16.mxu0 0
  %453 = vmatpush1.bf16.msra.mxu0 %v434
  %454 = vmatprep.subr.bf16.mxu0 0
  %455 = vmatpush1.bf16.msra.mxu0 %v435
  %456 = vmatprep.subr.bf16.mxu0 0
  %457 = vmatpush1.bf16.msra.mxu0 %v436
  %458 = vmatprep.subr.bf16.mxu0 0
  %459 = vmatpush1.bf16.msra.mxu0 %v437
  %460 = vmatprep.subr.bf16.mxu0 0
  %461 = vmatpush1.bf16.msra.mxu0 %v438
  %462 = vmatprep.subr.bf16.mxu0 0
  %463 = vmatpush1.bf16.msra.mxu0 %v439
  %464 = vmatprep.subr.bf16.mxu0 0
  %465 = vmatpush1.bf16.msra.mxu0 0
  %466 = vmatprep.subr.bf16.mxu0 0
  %467 = vmatpush1.bf16.msra.mxu0 0
  %468 = vmatprep.subr.bf16.mxu0 0
  %469 = vmatpush1.bf16.msra.mxu0 0
  %470 = vmatprep.subr.bf16.mxu0 0
  %471 = vmatpush1.bf16.msra.mxu0 0
  %472 = vmatprep.subr.bf16.mxu0 0
  %473 = vmatpush1.bf16.msra.mxu0 0
  %474 = vmatprep.subr.bf16.mxu0 0
  %475 = vmatpush1.bf16.msra.mxu0 0
  %476 = vmatprep.subr.bf16.mxu0 0
  %477 = vmatpush1.bf16.msra.mxu0 0
  %478 = vmatprep.subr.bf16.mxu0 0
  %479 = vmatpush1.bf16.msra.mxu0 0
  %480 = vmatprep.mubr.bf16.mxu0 0
  %481 = vmatmul.mubr.bf16.gmra.mrb[0].mxu0 %v394
  %v482 = vpop.f32.mrb[0].mxu0
  %v483 = vadd.f32 %v399, %v482
  %v484 = vpop.f32.mrb[0].mxu0
  %v485 = vpop.f32.mrb[0].mxu0
  %v486 = vadd.f32 %v399, %v485
  %v487 = vpop.f32.mrb[0].mxu0
  %488 = vdwg.mxu0
  %v489 = vmul.f32 %v483, 0.5
  %v490 = vmul.f32 %v486, 0.5
  %v491 = vmul.f32 %v483, 0.044715
  %v492 = vmul.f32 %v486, 0.044715
  %v493 = vmul.f32 %v491, %v483
  %v494 = vmul.f32 %v492, %v486
  %v495 = vmul.f32 %v493, %v483
  %v496 = vmul.f32 %v494, %v486
  %v497 = vadd.f32 %v483, %v495
  %v498 = vadd.f32 %v486, %v496
  %v499 = vmul.f32 %v497, 0.7978846
  %v500 = vmul.f32 %v498, 0.7978846
  %v501 = vtanh.pop %v499
  %v502 = vtanh.pop %v500
  %v503 = vadd.f32 %v501, 1.0
  %v504 = vadd.f32 %v502, 1.0
  %v505 = vmul.f32 %v489, %v503
  %v506 = vmul.f32 %v490, %v504
  %v507 = vld [vmem:[%s9] sm:$0xf]
  %v508 = vld [vmem:[%s9 + $0x4] sm:$0xf]
  %v509 = vld [vmem:[%s9 + $0x8] sm:$0xf]
  %v510 = vld [vmem:[%s9 + $0xc] sm:$0xf]
  %v511 = vld [vmem:[%s9 + $0x10] sm:$0xf]
  %v512 = vld [vmem:[%s9 + $0x14] sm:$0xf]
  %v513 = vld [vmem:[%s9 + $0x18] sm:$0xf]
  %v514 = vld [vmem:[%s9 + $0x1c] sm:$0xf]
  %v515 = vld [vmem:[%s9 + $0x20] sm:$0xf]
  %v516 = vld [vmem:[%s9 + $0x24] sm:$0xf]
  %v517 = vld [vmem:[%s9 + $0x28] sm:$0xf]
  %v518 = vld [vmem:[%s9 + $0x2c] sm:$0xf]
  %v519 = vld [vmem:[%s9 + $0x30] sm:$0xf]
  %v520 = vld [vmem:[%s9 + $0x34] sm:$0xf]
  %v521 = vld [vmem:[%s9 + $0x38] sm:$0xf]
  %v522 = vld [vmem:[%s9 + $0x3c] sm:$0xf]
  %v523 = vpack.c.bf16 %v506, %v505
  %v524 = vld [vmem:[%s12 + $0x2] sm:$0x1]
  %v525 = vlaneseq
  %v526 = vshrl.u32 %v525, 7
  %v527 = vsub.s32 0, %v526
  %v528 = vrot.slane %v524, %v527
  %v545 = vunpack.c.l.b16 %v507
  %v546 = vunpack.c.l.b16 %v508
  %v547 = vunpack.c.l.b16 %v509
  %v548 = vunpack.c.l.b16 %v510
  %v549 = vunpack.c.l.b16 %v511
  %v550 = vunpack.c.l.b16 %v512
  %v551 = vunpack.c.l.b16 %v513
  %v552 = vunpack.c.l.b16 %v514
  %v553 = vunpack.c.l.b16 %v515
  %v554 = vunpack.c.l.b16 %v516
  %v555 = vunpack.c.l.b16 %v517
  %v556 = vunpack.c.l.b16 %v518
  %v557 = vunpack.c.l.b16 %v519
  %v558 = vunpack.c.l.b16 %v520
  %v559 = vunpack.c.l.b16 %v521
  %v560 = vunpack.c.l.b16 %v522
  %v561 = vpack.c.b16 %v546, %v545
  %v562 = vpack.c.b16 %v548, %v547
  %v563 = vpack.c.b16 %v550, %v549
  %v564 = vpack.c.b16 %v552, %v551
  %v565 = vpack.c.b16 %v554, %v553
  %v566 = vpack.c.b16 %v556, %v555
  %v567 = vpack.c.b16 %v558, %v557
  %v568 = vpack.c.b16 %v560, %v559
  %577 = vmatprep.subr.bf16.mxu0 0
  %578 = vmatpush1.bf16.msra.mxu0 %v561
  %579 = vmatprep.subr.bf16.mxu0 0
  %580 = vmatpush1.bf16.msra.mxu0 %v562
  %581 = vmatprep.subr.bf16.mxu0 0
  %582 = vmatpush1.bf16.msra.mxu0 %v563
  %583 = vmatprep.subr.bf16.mxu0 0
  %584 = vmatpush1.bf16.msra.mxu0 %v564
  %585 = vmatprep.subr.bf16.mxu0 0
  %586 = vmatpush1.bf16.msra.mxu0 %v565
  %587 = vmatprep.subr.bf16.mxu0 0
  %588 = vmatpush1.bf16.msra.mxu0 %v566
  %589 = vmatprep.subr.bf16.mxu0 0
  %590 = vmatpush1.bf16.msra.mxu0 %v567
  %591 = vmatprep.subr.bf16.mxu0 0
  %592 = vmatpush1.bf16.msra.mxu0 %v568
  %593 = vmatprep.subr.bf16.mxu0 0
  %594 = vmatpush1.bf16.msra.mxu0 0
  %595 = vmatprep.subr.bf16.mxu0 0
  %596 = vmatpush1.bf16.msra.mxu0 0
  %597 = vmatprep.subr.bf16.mxu0 0
  %598 = vmatpush1.bf16.msra.mxu0 0
  %599 = vmatprep.subr.bf16.mxu0 0
  %600 = vmatpush1.bf16.msra.mxu0 0
  %601 = vmatprep.subr.bf16.mxu0 0
  %602 = vmatpush1.bf16.msra.mxu0 0
  %603 = vmatprep.subr.bf16.mxu0 0
  %604 = vmatpush1.bf16.msra.mxu0 0
  %605 = vmatprep.subr.bf16.mxu0 0
  %606 = vmatpush1.bf16.msra.mxu0 0
  %607 = vmatprep.subr.bf16.mxu0 0
  %608 = vmatpush1.bf16.msra.mxu0 0
  %609 = vmatprep.mubr.bf16.mxu0 0
  %610 = vmatmul.mubr.bf16.gmra.mrb[0].mxu0 %v523
  %v611 = vpop.f32.mrb[0].mxu0
  %v612 = vadd.f32 %v528, %v611
  %v613 = vpop.f32.mrb[0].mxu0
  %v614 = vpop.f32.mrb[0].mxu0
  %v615 = vadd.f32 %v528, %v614
  %v616 = vpop.f32.mrb[0].mxu0
  %617 = vdwg.mxu0
  %v618 = vld [vmem:[%s3] sm:$0xff]
  %v619 = vld [vmem:[%s3 + $0x8] sm:$0xff]
  %v620 = vld [vmem:[%s15] sm:$0xff]
  %vm621 = vcmask 64512
  %v623 = vsel %vm621, %v618, 0
  %v626 = vsel %vm621, %v619, 0
  %628 = vmatprep.subr.mxu0 0.0
  %629 = vmatpush1.msra.mxu0 %v620
  %630 = vmatprep.subr.mxu0 0.0
  %631 = vmatpush1.msra.mxu0 0.0
  %632 = vmatprep.subr.mxu0 0.0
  %633 = vmatpush1.msra.mxu0 0.0
  %634 = vmatprep.subr.mxu0 0.0
  %635 = vmatpush1.msra.mxu0 0.0
  %636 = vmatprep.subr.mxu0 0.0
  %637 = vmatpush1.msra.mxu0 0.0
  %638 = vmatprep.subr.mxu0 0.0
  %639 = vmatpush1.msra.mxu0 0.0
  %640 = vmatprep.subr.mxu0 0.0
  %641 = vmatpush1.msra.mxu0 0.0
  %642 = vmatprep.subr.mxu0 0.0
  %643 = vmatpush1.msra.mxu0 0.0
  %644 = vmatprep.subr.mxu0 0.0
  %645 = vmatpush1.msra.mxu0 0.0
  %646 = vmatprep.subr.mxu0 0.0
  %647 = vmatpush1.msra.mxu0 0.0
  %648 = vmatprep.subr.mxu0 0.0
  %649 = vmatpush1.msra.mxu0 0.0
  %650 = vmatprep.subr.mxu0 0.0
  %651 = vmatpush1.msra.mxu0 0.0
  %652 = vmatprep.subr.mxu0 0.0
  %653 = vmatpush1.msra.mxu0 0.0
  %654 = vmatprep.subr.mxu0 0.0
  %655 = vmatpush1.msra.mxu0 0.0
  %656 = vmatprep.subr.mxu0 0.0
  %657 = vmatpush1.msra.mxu0 0.0
  %658 = vmatprep.subr.mxu0 0.0
  %659 = vmatpush1.msra.mxu0 0.0
  %660 = vmatprep.subr.mxu0 0.0
  %661 = vmatpush1.msra.mxu0 0.0
  %662 = vmatprep.subr.mxu0 0.0
  %663 = vmatpush1.msra.mxu0 0.0
  %664 = vmatprep.subr.mxu0 0.0
  %665 = vmatpush1.msra.mxu0 0.0
  %666 = vmatprep.subr.mxu0 0.0
  %667 = vmatpush1.msra.mxu0 0.0
  %668 = vmatprep.subr.mxu0 0.0
  %669 = vmatpush1.msra.mxu0 0.0
  %670 = vmatprep.subr.mxu0 0.0
  %671 = vmatpush1.msra.mxu0 0.0
  %672 = vmatprep.subr.mxu0 0.0
  %673 = vmatpush1.msra.mxu0 0.0
  %674 = vmatprep.subr.mxu0 0.0
  %675 = vmatpush1.msra.mxu0 0.0
  %676 = vmatprep.subr.mxu0 0.0
  %677 = vmatpush1.msra.mxu0 0.0
  %678 = vmatprep.subr.mxu0 0.0
  %679 = vmatpush1.msra.mxu0 0.0
  %680 = vmatprep.subr.mxu0 0.0
  %681 = vmatpush1.msra.mxu0 0.0
  %682 = vmatprep.subr.mxu0 0.0
  %683 = vmatpush1.msra.mxu0 0.0
  %684 = vmatprep.subr.mxu0 0.0
  %685 = vmatpush1.msra.mxu0 0.0
  %686 = vmatprep.subr.mxu0 0.0
  %687 = vmatpush1.msra.mxu0 0.0
  %688 = vmatprep.subr.mxu0 0.0
  %689 = vmatpush1.msra.mxu0 0.0
  %690 = vmatprep.subr.mxu0 0.0
  %691 = vmatpush1.msra.mxu0 0.0
  %692 = vmatprep.mubr.f32.mxu0 0.0
  %693 = vmatmul.mubr.f32.gmra.mrb[0].mxu0 %v623
  %v694 = vpop.f32.mrb[0].mxu0
  %v695 = vadd.f32 0.0, %v694
  %v696 = vpop.f32.mrb[0].mxu0
  %697 = vmatprep.mubr.f32.mxu0 0.0
  %698 = vmatmul.mubr.f32.gmra.mrb[0].mxu0 %v626
  %v699 = vpop.f32.mrb[0].mxu0
  %v700 = vadd.f32 0.0, %v699
  %v701 = vpop.f32.mrb[0].mxu0
  %702 = vdwg.mxu0
  %v703 = vmul.f32 %v612, %v695
  %v704 = vmul.f32 %v615, %v700
  %v705 = vld [vmem:[%s16] sm:$0xff]
  %v706 = vld [vmem:[%s16 + $0x8] sm:$0xff]
  %v707 = vld [vmem:[%s16 + $0x10] sm:$0xff]
  %v708 = vld [vmem:[%s16 + $0x18] sm:$0xff]
  %v709 = vld [vmem:[%s16 + $0x20] sm:$0xff]
  %v710 = vld [vmem:[%s16 + $0x28] sm:$0xff]
  %v711 = vld [vmem:[%s16 + $0x30] sm:$0xff]
  %v712 = vld [vmem:[%s16 + $0x38] sm:$0xff]
  %v713 = vld [vmem:[%s16 + $0x40] sm:$0xff]
  %v714 = vld [vmem:[%s16 + $0x48] sm:$0xff]
  %v715 = vld [vmem:[%s16 + $0x50] sm:$0xff]
  %v716 = vld [vmem:[%s16 + $0x58] sm:$0xff]
  %v717 = vld [vmem:[%s16 + $0x60] sm:$0xff]
  %v718 = vld [vmem:[%s16 + $0x68] sm:$0xff]
  %v719 = vld [vmem:[%s16 + $0x70] sm:$0xff]
  %v720 = vld [vmem:[%s16 + $0x78] sm:$0xff]
  %721 = vmatprep.subr.mxu0 0.0
  %722 = vmatpush1.msra.mxu0 %v705
  %723 = vmatprep.subr.mxu0 0.0
  %724 = vmatpush1.msra.mxu0 %v706
  %725 = vmatprep.subr.mxu0 0.0
  %726 = vmatpush1.msra.mxu0 %v707
  %727 = vmatprep.subr.mxu0 0.0
  %728 = vmatpush1.msra.mxu0 %v708
  %729 = vmatprep.subr.mxu0 0.0
  %730 = vmatpush1.msra.mxu0 %v709
  %731 = vmatprep.subr.mxu0 0.0
  %732 = vmatpush1.msra.mxu0 %v710
  %733 = vmatprep.subr.mxu0 0.0
  %734 = vmatpush1.msra.mxu0 %v711
  %735 = vmatprep.subr.mxu0 0.0
  %736 = vmatpush1.msra.mxu0 %v712
  %737 = vmatprep.subr.mxu0 0.0
  %738 = vmatpush1.msra.mxu0 %v713
  %739 = vmatprep.subr.mxu0 0.0
  %740 = vmatpush1.msra.mxu0 %v714
  %741 = vmatprep.subr.mxu0 0.0
  %742 = vmatpush1.msra.mxu0 %v715
  %743 = vmatprep.subr.mxu0 0.0
  %744 = vmatpush1.msra.mxu0 %v716
  %745 = vmatprep.subr.mxu0 0.0
  %746 = vmatpush1.msra.mxu0 %v717
  %747 = vmatprep.subr.mxu0 0.0
  %748 = vmatpush1.msra.mxu0 %v718
  %749 = vmatprep.subr.mxu0 0.0
  %750 = vmatpush1.msra.mxu0 %v719
  %751 = vmatprep.subr.mxu0 0.0
  %752 = vmatpush1.msra.mxu0 %v720
  %753 = vmatprep.subr.mxu0 0.0
  %754 = vmatpush1.msra.mxu0 0.0
  %755 = vmatprep.subr.mxu0 0.0
  %756 = vmatpush1.msra.mxu0 0.0
  %757 = vmatprep.subr.mxu0 0.0
  %758 = vmatpush1.msra.mxu0 0.0
  %759 = vmatprep.subr.mxu0 0.0
  %760 = vmatpush1.msra.mxu0 0.0
  %761 = vmatprep.subr.mxu0 0.0
  %762 = vmatpush1.msra.mxu0 0.0
  %763 = vmatprep.subr.mxu0 0.0
  %764 = vmatpush1.msra.mxu0 0.0
  %765 = vmatprep.subr.mxu0 0.0
  %766 = vmatpush1.msra.mxu0 0.0
  %767 = vmatprep.subr.mxu0 0.0
  %768 = vmatpush1.msra.mxu0 0.0
  %769 = vmatprep.subr.mxu0 0.0
  %770 = vmatpush1.msra.mxu0 0.0
  %771 = vmatprep.subr.mxu0 0.0
  %772 = vmatpush1.msra.mxu0 0.0
  %773 = vmatprep.subr.mxu0 0.0
  %774 = vmatpush1.msra.mxu0 0.0
  %775 = vmatprep.subr.mxu0 0.0
  %776 = vmatpush1.msra.mxu0 0.0
  %777 = vmatprep.subr.mxu0 0.0
  %778 = vmatpush1.msra.mxu0 0.0
  %779 = vmatprep.subr.mxu0 0.0
  %780 = vmatpush1.msra.mxu0 0.0
  %781 = vmatprep.subr.mxu0 0.0
  %782 = vmatpush1.msra.mxu0 0.0
  %783 = vmatprep.subr.mxu0 0.0
  %784 = vmatpush1.msra.mxu0 0.0
  %785 = vmatprep.mubr.f32.mxu0 0.0
  %786 = vmatmul.mubr.f32.gmra.mrb[0].mxu0 %v703
  %v787 = vpop.f32.mrb[0].mxu0
  %v788 = vadd.f32 0.0, %v787
  %v789 = vpop.f32.mrb[0].mxu0
  %790 = vmatprep.mubr.f32.mxu0 0.0
  %791 = vmatmul.mubr.f32.gmra.mrb[0].mxu0 %v704
  %v792 = vpop.f32.mrb[0].mxu0
  %v793 = vadd.f32 0.0, %v792
  %v794 = vpop.f32.mrb[0].mxu0
  %795 = vdwg.mxu0
  %v796 = vunpack.c.l.bf16 %v283
  %v797 = vunpack.c.l.bf16 %v284
  %v798 = vadd.f32 %v796, %v788
  %v799 = vadd.f32 %v797, %v793
  %v800 = vld [vmem:[%s14] sm:$0x1]
  %v801 = vld [vmem:[%s14 + $0x1] sm:$0x1]
  %v802 = vsel %vm306, %v798, 0.0
  %803 = vadd.xlane.f32.xlu0 %v802
  %v804 = vpop.xlane.xlu0 %803
  %v805 = vsel %vm306, %v799, 0.0
  %806 = vadd.xlane.f32.xlu0 %v805
  %v807 = vpop.xlane.xlu0 %806
  %v808 = vrcp.pop 32.0
  %v809 = vmul.f32 %v804, %v808
  %v810 = vmul.f32 %v807, %v808
  %v811 = vsub.f32 %v798, %v809
  %v812 = vsub.f32 %v799, %v810
  %v813 = vmul.f32 %v811, %v811
  %v814 = vmul.f32 %v812, %v812
  %v815 = vsel %vm306, %v813, 0.0
  %816 = vadd.xlane.f32.xlu0 %v815
  %v817 = vpop.xlane.xlu0 %816
  %v818 = vsel %vm306, %v814, 0.0
  %819 = vadd.xlane.f32.xlu0 %v818
  %v820 = vpop.xlane.xlu0 %819
  %v821 = vmul.f32 %v817, %v808
  %v822 = vmul.f32 %v820, %v808
  %v823 = vadd.f32 %v821, 1e-05
  %v824 = vadd.f32 %v822, 1e-05
  %v825 = vrsqrt.pop %v823
  %v826 = vrsqrt.pop %v824
  %v827 = vmul.f32 %v811, %v825
  %v828 = vmul.f32 %v812, %v826
  %v829 = vlaneseq
  %v830 = vshrl.u32 %v829, 7
  %v831 = vsub.s32 0, %v830
  %v832 = vrot.slane %v800, %v831
  %v833 = vmul.f32 %v827, %v832
  %v834 = vmul.f32 %v828, %v832
  %v835 = vlaneseq
  %v836 = vshrl.u32 %v835, 7
  %v837 = vsub.s32 0, %v836
  %v838 = vrot.slane %v801, %v837
  %v839 = vadd.f32 %v833, %v838
  %v840 = vadd.f32 %v834, %v838
  %v841 = vld [vmem:[%s10] sm:$0xf]
  %v842 = vld [vmem:[%s10 + $0x4] sm:$0xf]
  %v843 = vld [vmem:[%s10 + $0x8] sm:$0xf]
  %v844 = vld [vmem:[%s10 + $0xc] sm:$0xf]
  %v845 = vpack.c.bf16 %v840, %v839
  %v846 = vld [vmem:[%s13] sm:$0x1]
  %v848 = vlaneseq
  %v849 = vshrl.u32 %v848, 7
  %v850 = vsub.s32 0, %v849
  %v851 = vrot.slane %v846, %v850
  %v857 = vunpack.c.l.b16 %v841
  %v858 = vunpack.c.l.b16 %v842
  %v859 = vunpack.c.l.b16 %v843
  %v860 = vunpack.c.l.b16 %v844
  %v861 = vpack.c.b16 %v858, %v857
  %v862 = vpack.c.b16 %v860, %v859
  %v866 = vsel %vm306, %v845, 0
  %868 = vmatprep.subr.bf16.mxu0 0
  %869 = vmatpush1.bf16.msra.mxu0 %v861
  %870 = vmatprep.subr.bf16.mxu0 0
  %871 = vmatpush1.bf16.msra.mxu0 %v862
  %872 = vmatprep.subr.bf16.mxu0 0
  %873 = vmatpush1.bf16.msra.mxu0 0
  %874 = vmatprep.subr.bf16.mxu0 0
  %875 = vmatpush1.bf16.msra.mxu0 0
  %876 = vmatprep.subr.bf16.mxu0 0
  %877 = vmatpush1.bf16.msra.mxu0 0
  %878 = vmatprep.subr.bf16.mxu0 0
  %879 = vmatpush1.bf16.msra.mxu0 0
  %880 = vmatprep.subr.bf16.mxu0 0
  %881 = vmatpush1.bf16.msra.mxu0 0
  %882 = vmatprep.subr.bf16.mxu0 0
  %883 = vmatpush1.bf16.msra.mxu0 0
  %884 = vmatprep.subr.bf16.mxu0 0
  %885 = vmatpush1.bf16.msra.mxu0 0
  %886 = vmatprep.subr.bf16.mxu0 0
  %887 = vmatpush1.bf16.msra.mxu0 0
  %888 = vmatprep.subr.bf16.mxu0 0
  %889 = vmatpush1.bf16.msra.mxu0 0
  %890 = vmatprep.subr.bf16.mxu0 0
  %891 = vmatpush1.bf16.msra.mxu0 0
  %892 = vmatprep.subr.bf16.mxu0 0
  %893 = vmatpush1.bf16.msra.mxu0 0
  %894 = vmatprep.subr.bf16.mxu0 0
  %895 = vmatpush1.bf16.msra.mxu0 0
  %896 = vmatprep.subr.bf16.mxu0 0
  %897 = vmatpush1.bf16.msra.mxu0 0
  %898 = vmatprep.subr.bf16.mxu0 0
  %899 = vmatpush1.bf16.msra.mxu0 0
  %900 = vmatprep.mubr.bf16.mxu0 0
  %901 = vmatmul.mubr.bf16.gmra.mrb[0].mxu0 %v866
  %v902 = vpop.f32.mrb[0].mxu0
  %v903 = vadd.f32 %v851, %v902
  %v904 = vpop.f32.mrb[0].mxu0
  %v905 = vpop.f32.mrb[0].mxu0
  %v906 = vadd.f32 %v851, %v905
  %v907 = vpop.f32.mrb[0].mxu0
  %908 = vdwg.mxu0
  %v909 = vmul.f32 %v903, 0.5
  %v910 = vmul.f32 %v906, 0.5
  %v911 = vmul.f32 %v903, 0.044715
  %v912 = vmul.f32 %v906, 0.044715
  %v913 = vmul.f32 %v911, %v903
  %v914 = vmul.f32 %v912, %v906
  %v915 = vmul.f32 %v913, %v903
  %v916 = vmul.f32 %v914, %v906
  %v917 = vadd.f32 %v903, %v915
  %v918 = vadd.f32 %v906, %v916
  %v919 = vmul.f32 %v917, 0.7978846
  %v920 = vmul.f32 %v918, 0.7978846
  %v921 = vtanh.pop %v919
  %v922 = vtanh.pop %v920
  %v923 = vadd.f32 %v921, 1.0
  %v924 = vadd.f32 %v922, 1.0
  %v925 = vmul.f32 %v909, %v923
  %v926 = vmul.f32 %v910, %v924
  %v927 = vld [vmem:[%s11] sm:$0xf]
  %v928 = vld [vmem:[%s11 + $0x4] sm:$0xf]
  %v929 = vld [vmem:[%s11 + $0x8] sm:$0xf]
  %v930 = vld [vmem:[%s11 + $0xc] sm:$0xf]
  %v931 = vld [vmem:[%s11 + $0x10] sm:$0xf]
  %v932 = vld [vmem:[%s11 + $0x14] sm:$0xf]
  %v933 = vld [vmem:[%s11 + $0x18] sm:$0xf]
  %v934 = vld [vmem:[%s11 + $0x1c] sm:$0xf]
  %v935 = vld [vmem:[%s11 + $0x20] sm:$0xf]
  %v936 = vld [vmem:[%s11 + $0x24] sm:$0xf]
  %v937 = vld [vmem:[%s11 + $0x28] sm:$0xf]
  %v938 = vld [vmem:[%s11 + $0x2c] sm:$0xf]
  %v939 = vld [vmem:[%s11 + $0x30] sm:$0xf]
  %v940 = vld [vmem:[%s11 + $0x34] sm:$0xf]
  %v941 = vld [vmem:[%s11 + $0x38] sm:$0xf]
  %v942 = vld [vmem:[%s11 + $0x3c] sm:$0xf]
  %v943 = vpack.c.bf16 %v926, %v925
  %v944 = vld [vmem:[%s14 + $0x4] sm:$0x1]
  %v945 = vlaneseq
  %v946 = vshrl.u32 %v945, 7
  %v947 = vsub.s32 0, %v946
  %v948 = vrot.slane %v944, %v947
  %v965 = vunpack.c.l.b16 %v927
  %v966 = vunpack.c.l.b16 %v928
  %v967 = vunpack.c.l.b16 %v929
  %v968 = vunpack.c.l.b16 %v930
  %v969 = vunpack.c.l.b16 %v931
  %v970 = vunpack.c.l.b16 %v932
  %v971 = vunpack.c.l.b16 %v933
  %v972 = vunpack.c.l.b16 %v934
  %v973 = vunpack.c.l.b16 %v935
  %v974 = vunpack.c.l.b16 %v936
  %v975 = vunpack.c.l.b16 %v937
  %v976 = vunpack.c.l.b16 %v938
  %v977 = vunpack.c.l.b16 %v939
  %v978 = vunpack.c.l.b16 %v940
  %v979 = vunpack.c.l.b16 %v941
  %v980 = vunpack.c.l.b16 %v942
  %v981 = vpack.c.b16 %v966, %v965
  %v982 = vpack.c.b16 %v968, %v967
  %v983 = vpack.c.b16 %v970, %v969
  %v984 = vpack.c.b16 %v972, %v971
  %v985 = vpack.c.b16 %v974, %v973
  %v986 = vpack.c.b16 %v976, %v975
  %v987 = vpack.c.b16 %v978, %v977
  %v988 = vpack.c.b16 %v980, %v979
  %997 = vmatprep.subr.bf16.mxu0 0
  %998 = vmatpush1.bf16.msra.mxu0 %v981
  %999 = vmatprep.subr.bf16.mxu0 0
  %1000 = vmatpush1.bf16.msra.mxu0 %v982
  %1001 = vmatprep.subr.bf16.mxu0 0
  %1002 = vmatpush1.bf16.msra.mxu0 %v983
  %1003 = vmatprep.subr.bf16.mxu0 0
  %1004 = vmatpush1.bf16.msra.mxu0 %v984
  %1005 = vmatprep.subr.bf16.mxu0 0
  %1006 = vmatpush1.bf16.msra.mxu0 %v985
  %1007 = vmatprep.subr.bf16.mxu0 0
  %1008 = vmatpush1.bf16.msra.mxu0 %v986
  %1009 = vmatprep.subr.bf16.mxu0 0
  %1010 = vmatpush1.bf16.msra.mxu0 %v987
  %1011 = vmatprep.subr.bf16.mxu0 0
  %1012 = vmatpush1.bf16.msra.mxu0 %v988
  %1013 = vmatprep.subr.bf16.mxu0 0
  %1014 = vmatpush1.bf16.msra.mxu0 0
  %1015 = vmatprep.subr.bf16.mxu0 0
  %1016 = vmatpush1.bf16.msra.mxu0 0
  %1017 = vmatprep.subr.bf16.mxu0 0
  %1018 = vmatpush1.bf16.msra.mxu0 0
  %1019 = vmatprep.subr.bf16.mxu0 0
  %1020 = vmatpush1.bf16.msra.mxu0 0
  %1021 = vmatprep.subr.bf16.mxu0 0
  %1022 = vmatpush1.bf16.msra.mxu0 0
  %1023 = vmatprep.subr.bf16.mxu0 0
  %1024 = vmatpush1.bf16.msra.mxu0 0
  %1025 = vmatprep.subr.bf16.mxu0 0
  %1026 = vmatpush1.bf16.msra.mxu0 0
  %1027 = vmatprep.subr.bf16.mxu0 0
  %1028 = vmatpush1.bf16.msra.mxu0 0
  %1029 = vmatprep.mubr.bf16.mxu0 0
  %1030 = vmatmul.mubr.bf16.gmra.mrb[0].mxu0 %v943
  %v1031 = vpop.f32.mrb[0].mxu0
  %v1032 = vadd.f32 %v948, %v1031
  %v1033 = vpop.f32.mrb[0].mxu0
  %v1034 = vpop.f32.mrb[0].mxu0
  %v1035 = vadd.f32 %v948, %v1034
  %v1036 = vpop.f32.mrb[0].mxu0
  %1037 = vdwg.mxu0
  %v1038 = vadd.f32 %v839, %v1032
  %v1039 = vadd.f32 %v840, %v1035
  %v1040 = vld [vmem:[%s14 + $0x2] sm:$0x1]
  %v1041 = vld [vmem:[%s14 + $0x3] sm:$0x1]
  %v1042 = vsel %vm306, %v1038, 0.0
  %1043 = vadd.xlane.f32.xlu0 %v1042
  %v1044 = vpop.xlane.xlu0 %1043
  %v1045 = vsel %vm306, %v1039, 0.0
  %1046 = vadd.xlane.f32.xlu0 %v1045
  %v1047 = vpop.xlane.xlu0 %1046
  %v1048 = vmul.f32 %v1044, %v808
  %v1049 = vmul.f32 %v1047, %v808
  %v1050 = vsub.f32 %v1038, %v1048
  %v1051 = vsub.f32 %v1039, %v1049
  %v1052 = vmul.f32 %v1050, %v1050
  %v1053 = vmul.f32 %v1051, %v1051
  %v1054 = vsel %vm306, %v1052, 0.0
  %1055 = vadd.xlane.f32.xlu0 %v1054
  %v1056 = vpop.xlane.xlu0 %1055
  %v1057 = vsel %vm306, %v1053, 0.0
  %1058 = vadd.xlane.f32.xlu0 %v1057
  %v1059 = vpop.xlane.xlu0 %1058
  %v1060 = vmul.f32 %v1056, %v808
  %v1061 = vmul.f32 %v1059, %v808
  %v1062 = vadd.f32 %v1060, 1e-05
  %v1063 = vadd.f32 %v1061, 1e-05
  %v1064 = vrsqrt.pop %v1062
  %v1065 = vrsqrt.pop %v1063
  %v1066 = vmul.f32 %v1050, %v1064
  %v1067 = vmul.f32 %v1051, %v1065
  %v1068 = vlaneseq
  %v1069 = vshrl.u32 %v1068, 7
  %v1070 = vsub.s32 0, %v1069
  %v1071 = vrot.slane %v1040, %v1070
  %v1072 = vmul.f32 %v1066, %v1071
  %v1073 = vmul.f32 %v1067, %v1071
  %v1074 = vlaneseq
  %v1075 = vshrl.u32 %v1074, 7
  %v1076 = vsub.s32 0, %v1075
  %v1077 = vrot.slane %v1041, %v1076
  %v1078 = vadd.f32 %v1072, %v1077
  %v1079 = vadd.f32 %v1073, %v1077
  %v1080 = vld [vmem:[%s4] sm:$0xff]
  %v1081 = vld [vmem:[%s4 + $0x8] sm:$0xff]
  %1083 = vset.pattern.permute.xlu0 0
  %1084 = vperm.xlu0 %1083, %v1080
  %v1085 = vpop.permute.xlu0 %1084
  %1088 = vset.pattern.permute.xlu0 0
  %1089 = vperm.xlu0 %1088, %v1081
  %v1090 = vpop.permute.xlu0 %1089
  %v1092 = vmul.f32 %v1078, %v1085
  %v1093 = vmul.f32 %v1079, %v1090
  %1094 = vst.msk [vmem:[%s17] sm:$0xff] %vm306, %v1092
  %1095 = vst.msk [vmem:[%s17 + $0x8] sm:$0xff] %vm306, %v1093
  // Predicated region
  $region70: #{encoder_layer_forward.2} parent=0 // pred_check
    _
  $region71: #{encoder_layer_forward.2} parent=0 // pred_check_branch
    %1097 = sbr.rel (0) target = $region73
  $region72: #{encoder_layer_forward.2} parent=0 // pred_region
    _
  $region73: #{encoder_layer_forward.2} parent=0 // pred_fallthru
    _
  // Predicated region
  $region74: #{encoder_layer_forward.2} parent=0 // pred_check
    _
  $region75: #{encoder_layer_forward.2} parent=0 // pred_check_branch
    %1099 = sbr.rel (0) target = $region77
  $region76: #{encoder_layer_forward.2} parent=0 // pred_region
    _
  $region77: #{encoder_layer_forward.2} parent=0 // pred_fallthru
    _

</llo_original>
